<compile_context>
chip_gen: v7x
topology: tpu7x:2x2x1
jax: 0.10.0
libtpu: 0.0.40
codegen_flags: <defaults>
</compile_context>

<pallas_src>
import functools

import jax
import jax.numpy as jnp
from jax import lax
from jax.experimental import pallas as pl
from jax.experimental.pallas import tpu as pltpu


_NEG_BIG = -1.0e30  # finite empty-segment fill so f32/bf16 math stays NaN-free
# TODO(synk): reference global_max_pool yields -inf rows for graphs with zero
#             nodes; this kernel produces rows derived from -1e30 instead.


def _silu(v):
    return v * jax.nn.sigmoid(v)


def adaptive_pooling_kernel(
    # streamed per node tile
    xa_ref, brow_ref,
    # parameters (constant block index across the grid -> fetched once)
    w1_ref, vec_ref, wf_ref,
    # output
    out_ref,
    # VMEM accumulators (persist across node tiles)
    acc_sum_ref, acc_attn_ref, acc_max_ref, counts_ref, m_ref, l_ref,
    *, num_graphs: int, b_pad: int, hidden: int, h2: int, eps: float,
    use_bf16: bool,
):
    t = pl.program_id(0)
    last = pl.num_programs(0) - 1
    H = hidden
    mxu_dtype = jnp.bfloat16 if use_bf16 else jnp.float32

    @pl.when(t == 0)
    def _init():
        acc_sum_ref[...] = jnp.zeros_like(acc_sum_ref)
        acc_attn_ref[...] = jnp.zeros_like(acc_attn_ref)
        acc_max_ref[...] = jnp.full(acc_max_ref.shape, _NEG_BIG, acc_max_ref.dtype)
        counts_ref[...] = jnp.zeros_like(counts_ref)
        m_ref[...] = jnp.full(m_ref.shape, _NEG_BIG, m_ref.dtype)
        l_ref[...] = jnp.zeros_like(l_ref)

    xa = xa_ref[...]                                  # [tile_n, H+1] f32
    x = xa[:, 0:H]                                    # [tile_n, H]   node features
    id_col = xa[:, H:H + 1]                           # [tile_n, 1]   batch id (-1 = pad)
    brow = brow_ref[...]                              # [1, tile_n]   int32 batch ids
    tile_n = x.shape[0]
    x_mx = x.astype(mxu_dtype)

    # packed 1-row parameters
    b1 = vec_ref[0:1, 0:h2]                           # [1, h2]
    w2t = vec_ref[1:2, 0:h2]                          # [1, h2]  (kept f32, used on VPU)
    b2 = vec_ref[2:3, 0:1]                            # [1, 1]

    # ---- attention scores: Linear(H, H/2) -> SiLU -> Linear(H/2, 1) ----------
    h1 = jnp.dot(x_mx, w1_ref[...].astype(mxu_dtype),
                 preferred_element_type=jnp.float32) + b1
    h1 = _silu(h1)                                                # [tile_n, h2] f32
    # width-1 matmul replaced by VPU multiply + lane reduce (keeps MXU free).
    scores = jnp.sum(h1 * w2t, axis=-1, keepdims=True) + b2       # [tile_n, 1]
    valid = id_col >= 0.0                                         # padded rows excluded
    scores = jnp.where(valid, scores, _NEG_BIG)

    # ---- online softmax over dim=0 (ALL nodes of ALL graphs) -----------------
    m_old = m_ref[...]                                            # [1, 1]
    m_new = jnp.maximum(m_old, jnp.max(scores, axis=0, keepdims=True))
    alpha = jnp.exp(m_old - m_new)                                # [1, 1]
    p = jnp.where(valid, jnp.exp(scores - m_new), 0.0)            # [tile_n, 1]
    l_ref[...] = alpha * l_ref[...] + jnp.sum(p, axis=0, keepdims=True)
    m_ref[...] = m_new

    # ---- fused segment reductions: one MXU pass for sum / attn-num / counts --
    gid = lax.broadcasted_iota(jnp.int32, (b_pad, tile_n), 0)     # [b_pad, tile_n]
    mask = ((gid == brow) & (brow >= 0)).astype(mxu_dtype)        # one-hot graphs
    rhs = jnp.concatenate(
        [x, p * x, jnp.ones((tile_n, 1), jnp.float32)], axis=-1)  # [tile_n, 2H+1]
    seg = jnp.dot(mask, rhs.astype(mxu_dtype),
                  preferred_element_type=jnp.float32)             # [b_pad, 2H+1]
    acc_sum_ref[...] += seg[:, 0:H]
    acc_attn_ref[...] = alpha * acc_attn_ref[...] + seg[:, H:2 * H]
    counts_ref[...] += seg[:, 2 * H:2 * H + 1]

    # ---- segment max: register-resident tile max, one dense scratch update ---
    rows = []
    for b in range(num_graphs):                      # num_graphs is small & static
        xb = jnp.where(id_col == float(b), x, _NEG_BIG)           # [tile_n, H]
        rows.append(jnp.max(xb, axis=0, keepdims=True))           # [1, H]
    if b_pad > num_graphs:
        rows.append(jnp.full((b_pad - num_graphs, H), _NEG_BIG, jnp.float32))
    tile_max = jnp.concatenate(rows, axis=0)                      # [b_pad, H]
    acc_max_ref[...] = jnp.maximum(acc_max_ref[...], tile_max)

    # ---- finalize on the last node tile --------------------------------------
    @pl.when(t == last)
    def _finalize():
        # exact divides: runs once, keeps the f32 path tight.
        counts = jnp.maximum(counts_ref[...], 1.0)
        mean_pool = acc_sum_ref[...] / counts                     # [b_pad, H]
        attn_pool = acc_attn_ref[...] / jnp.maximum(l_ref[...], 1e-30)
        max_pool = acc_max_ref[...]

        wf = wf_ref[...].astype(mxu_dtype)                        # [3H, H]
        # fusion Linear(3H, H) without a lane-axis concat: three wf slices.
        y = (jnp.dot(mean_pool.astype(mxu_dtype), wf[0:H],
                     preferred_element_type=jnp.float32)
             + jnp.dot(max_pool.astype(mxu_dtype), wf[H:2 * H],
                       preferred_element_type=jnp.float32)
             + jnp.dot(attn_pool.astype(mxu_dtype), wf[2 * H:3 * H],
                       preferred_element_type=jnp.float32)
             + vec_ref[3:4, 0:H])                                 # + bf
        mu = jnp.mean(y, axis=-1, keepdims=True)
        var = jnp.mean((y - mu) ** 2, axis=-1, keepdims=True)
        y = (y - mu) * lax.rsqrt(var + eps)
        y = y * vec_ref[4:5, 0:H] + vec_ref[5:6, 0:H]             # gamma, beta
        out_ref[...] = _silu(y)


def adaptive_pooling(x, batch, params, num_graphs, *, tile_n=1024, use_bf16=True):
    """x: [N, H] float, batch: [N] int in [0, num_graphs). Returns [num_graphs, H] f32."""
    N, H = x.shape
    h2 = params["w1"].shape[1]
    assert tile_n % 128 == 0, "tile_n must be a multiple of 128"
    assert h2 <= H

    b_pad = max(8, ((num_graphs + 7) // 8) * 8)       # sublane-aligned graph rows
    num_tiles = pl.cdiv(N, tile_n)
    n_pad = num_tiles * tile_n

    # x stream augmented with the batch id as one extra lane:
    #   padded rows: features 0, id -1 (excluded from every reduction).
    x_aug = jnp.zeros((n_pad, H + 1), jnp.float32)
    x_aug = x_aug.at[:, H].set(-1.0)
    x_aug = x_aug.at[:N, :H].set(x.astype(jnp.float32))
    x_aug = x_aug.at[:N, H].set(batch.astype(jnp.float32))

    batch_pad = jnp.full((n_pad,), -1, jnp.int32).at[:N].set(batch.astype(jnp.int32))
    brow = batch_pad.reshape(1, n_pad)                # graph ids, lane layout

    mxu_dt = jnp.bfloat16 if use_bf16 else jnp.float32
    w1 = params["w1"].astype(mxu_dt)                                  # [H, H/2]
    wf = params["wf"].astype(mxu_dt)                                  # [3H, H]

    # pack all 1-row params into a single [8, H] f32 block (rows: b1, w2t, b2,
    # bf, gamma, beta, 0, 0).
    vec_pack = jnp.zeros((8, H), jnp.float32)
    vec_pack = vec_pack.at[0, :h2].set(params["b1"].reshape(-1).astype(jnp.float32))
    vec_pack = vec_pack.at[1, :h2].set(params["w2"].reshape(-1).astype(jnp.float32))
    vec_pack = vec_pack.at[2, 0].set(params["b2"].reshape(()).astype(jnp.float32))
    vec_pack = vec_pack.at[3, :H].set(params["bf"].reshape(-1).astype(jnp.float32))
    vec_pack = vec_pack.at[4, :H].set(params["gamma"].reshape(-1).astype(jnp.float32))
    vec_pack = vec_pack.at[5, :H].set(params["beta"].reshape(-1).astype(jnp.float32))

    in_specs = [
        pl.BlockSpec((tile_n, H + 1), lambda t: (t, 0)),   # x | batch-id stream
        pl.BlockSpec((1, tile_n), lambda t: (0, t)),       # batch ids (lane layout)
        pl.BlockSpec(w1.shape, lambda t: (0, 0)),          # attention Linear 1
        pl.BlockSpec((8, H), lambda t: (0, 0)),            # packed 1-row params
        pl.BlockSpec(wf.shape, lambda t: (0, 0)),          # fusion Linear weight
    ]
    out_specs = pl.BlockSpec((b_pad, H), lambda t: (0, 0))    # resident accumulator output

    scratch_shapes = [
        pltpu.VMEM((b_pad, H), jnp.float32),   # segment sum
        pltpu.VMEM((b_pad, H), jnp.float32),   # attention numerator
        pltpu.VMEM((b_pad, H), jnp.float32),   # segment max
        pltpu.VMEM((b_pad, 1), jnp.float32),   # per-graph node counts
        pltpu.VMEM((1, 1), jnp.float32),       # running softmax max (m)
        pltpu.VMEM((1, 1), jnp.float32),       # running softmax denominator (l)
    ]

    kernel = functools.partial(
        adaptive_pooling_kernel,
        num_graphs=num_graphs, b_pad=b_pad, hidden=H, h2=h2, eps=1e-5,
        use_bf16=use_bf16)

    flops = int(2 * n_pad * H * h2 + 2 * n_pad * b_pad * (2 * H + 1)
                + 6 * b_pad * H * H + num_graphs * n_pad * H)
    transcendentals = int(n_pad * (h2 + 1) + b_pad * (H + 1))
    bytes_accessed = int(4 * (n_pad * (H + 2) + H * h2 + 3 * H * H
                              + 8 * H + b_pad * H))

    out_padded = pl.pallas_call(
        kernel,
        out_shape=jax.ShapeDtypeStruct((b_pad, H), jnp.float32),
        grid_spec=pltpu.PrefetchScalarGridSpec(
            num_scalar_prefetch=0,
            grid=(num_tiles,),
            in_specs=in_specs,
            out_specs=out_specs,
            scratch_shapes=scratch_shapes),
        compiler_params=pltpu.CompilerParams(
            dimension_semantics=("arbitrary",),      # node-tile axis is a reduction
            vmem_limit_bytes=32 * 1024 * 1024),
        cost_estimate=pl.CostEstimate(
            flops=flops, transcendentals=transcendentals,
            bytes_accessed=bytes_accessed),
    )(x_aug, brow, w1, vec_pack, wf)

    return out_padded[:num_graphs]


def init_params(key, hidden_dim):
    h2 = hidden_dim // 2
    ks = jax.random.split(key, 6)
    scale = lambda fan_in: 1.0 / jnp.sqrt(jnp.float32(fan_in))
    return {
        "w1": jax.random.normal(ks[0], (hidden_dim, h2), jnp.float32) * scale(hidden_dim),
        "b1": jax.random.normal(ks[1], (1, h2), jnp.float32) * 0.01,
        "w2": jax.random.normal(ks[2], (h2, 1), jnp.float32) * scale(h2),
        "b2": jax.random.normal(ks[3], (1, 1), jnp.float32) * 0.01,
        "wf": jax.random.normal(ks[4], (3 * hidden_dim, hidden_dim), jnp.float32) * scale(3 * hidden_dim),
        "bf": jax.random.normal(ks[5], (1, hidden_dim), jnp.float32) * 0.01,
        "gamma": jnp.ones((1, hidden_dim), jnp.float32),
        "beta": jnp.zeros((1, hidden_dim), jnp.float32),
    }


def reference(x, batch, params, num_graphs):
    """Pure-JAX f32 reference matching the PyTorch module."""
    w1, b1, w2, b2 = params["w1"], params["b1"], params["w2"], params["b2"]
    wf, bf, gamma, beta = params["wf"], params["bf"], params["gamma"], params["beta"]
    onehot = jax.nn.one_hot(batch, num_graphs, dtype=jnp.float32).T       # [B, N]
    seg_sum = onehot @ x
    counts = onehot.sum(axis=1, keepdims=True)
    mean_pool = seg_sum / jnp.maximum(counts, 1.0)
    masked = jnp.where(onehot[:, :, None] > 0.5, x[None, :, :], -jnp.inf)
    max_pool = masked.max(axis=1)
    h1 = jax.nn.silu(x @ w1 + b1)
    scores = h1 @ w2 + b2
    attn_w = jax.nn.softmax(scores, axis=0)
    attn_pool = onehot @ (x * attn_w)
    combined = jnp.concatenate([mean_pool, max_pool, attn_pool], axis=-1)
    y = combined @ wf + bf
    mu = y.mean(-1, keepdims=True)
    var = ((y - mu) ** 2).mean(-1, keepdims=True)
    y = (y - mu) / jnp.sqrt(var + 1e-5) * gamma + beta
    return jax.nn.silu(y)


if __name__ == "__main__":
    key = jax.random.PRNGKey(0)
    k_x, k_p = jax.random.split(key)

    hidden_dim = 32
    num_graphs = 3
    nodes_per_graph = (80, 70, 50)
    num_nodes = sum(nodes_per_graph)            # 200 nodes

    x = jax.random.normal(k_x, (num_nodes, hidden_dim), jnp.float32)
    batch = jnp.concatenate(
        [jnp.full((n,), g, jnp.int32) for g, n in enumerate(nodes_per_graph)])
    params = init_params(k_p, hidden_dim)

    ref = reference(x, batch, params, num_graphs)

    # multi-tile streaming path (2 node tiles of 128), exact-dtype MXU inputs.
    out_small = jax.block_until_ready(
        adaptive_pooling(x, batch, params, num_graphs, tile_n=128, use_bf16=False))
    assert out_small.shape == (num_graphs, hidden_dim)
    err_small = float(jnp.max(jnp.abs(out_small - ref)))
    assert jnp.allclose(out_small, ref, atol=5e-3, rtol=5e-3), \
        f"f32 tile_n=128 path max abs err {err_small}"

    # default tile size (single 1024-row tile here), f32 MXU inputs.
    out_f32 = jax.block_until_ready(
        adaptive_pooling(x, batch, params, num_graphs, use_bf16=False))
    assert out_f32.shape == (num_graphs, hidden_dim)
    err_f32 = float(jnp.max(jnp.abs(out_f32 - ref)))
    assert jnp.allclose(out_f32, ref, atol=5e-3, rtol=5e-3), \
        f"f32 path max abs err {err_f32}"

    # fast path (bf16 MXU inputs, f32 accumulate) — looser check.
    out_bf16 = jax.block_until_ready(
        adaptive_pooling(x, batch, params, num_graphs, use_bf16=True))
    assert out_bf16.shape == (num_graphs, hidden_dim)
    err_bf16 = float(jnp.max(jnp.abs(out_bf16 - ref)))
    assert jnp.allclose(out_bf16, ref, atol=5e-2, rtol=5e-2), \
        f"bf16 path max abs err {err_bf16}"

    print("KERNEL_OK")
</pallas_src>

<mosaic_0001>
module attributes {stable_mosaic.version = 11 : i64} {
  func.func @adaptive_pooling_kernel(%arg0: i32, %arg1: memref<128x33xf32, #tpu.memory_space<vmem>>, %arg2: memref<1x128xi32, #tpu.memory_space<vmem>>, %arg3: memref<32x16xf32, #tpu.memory_space<vmem>>, %arg4: memref<8x32xf32, #tpu.memory_space<vmem>>, %arg5: memref<96x32xf32, #tpu.memory_space<vmem>>, %arg6: memref<8x32xf32, #tpu.memory_space<vmem>>, %arg7: memref<8x32xf32, #tpu.memory_space<vmem>>, %arg8: memref<8x32xf32, #tpu.memory_space<vmem>>, %arg9: memref<8x32xf32, #tpu.memory_space<vmem>>, %arg10: memref<8x1xf32, #tpu.memory_space<vmem>>, %arg11: memref<1x1xf32, #tpu.memory_space<vmem>>, %arg12: memref<1x1xf32, #tpu.memory_space<vmem>>) attributes {dimension_semantics = [#tpu.dimension_semantics<arbitrary>], iteration_bounds = array<i64: 2>, scalar_prefetch = 0 : i64, scratch_operands = 6 : i64, tpu.core_type = #tpu.core_type<tc>, window_params = [{transform_indices = @transform_0, window_bounds = array<i64: 128, 33>}, {transform_indices = @transform_1, window_bounds = array<i64: 1, 128>}, {pipeline_mode = #tpu.pipeline_mode<synchronous>, transform_indices = @transform_2, window_bounds = array<i64: 32, 16>}, {pipeline_mode = #tpu.pipeline_mode<synchronous>, transform_indices = @transform_3, window_bounds = array<i64: 8, 32>}, {pipeline_mode = #tpu.pipeline_mode<synchronous>, transform_indices = @transform_4, window_bounds = array<i64: 96, 32>}, {pipeline_mode = #tpu.pipeline_mode<synchronous>, transform_indices = @transform_5, window_bounds = array<i64: 8, 32>}]} {
    %c0_i32 = arith.constant 0 : i32
    %0 = arith.cmpi eq, %arg0, %c0_i32 : i32
    %1 = arith.extui %0 : i1 to i32
    %c0_i32_0 = arith.constant 0 : i32
    %2 = arith.cmpi ne, %1, %c0_i32_0 : i32
    scf.if %2 {
      %cst_55 = arith.constant 0.000000e+00 : f32
      %108 = vector.broadcast %cst_55 : f32 to vector<8x32xf32>
      %c0_56 = arith.constant 0 : index
      %c0_57 = arith.constant 0 : index
      %109 = vector.load %arg7[%c0_56, %c0_57] : memref<8x32xf32, #tpu.memory_space<vmem>>, vector<8x32xf32>
      tpu.vector_store %arg7[%c0_56, %c0_57], %108 {strides = array<i32>} : memref<8x32xf32, #tpu.memory_space<vmem>>, vector<8x32xf32>,
      %cst_58 = arith.constant 0.000000e+00 : f32
      %110 = vector.broadcast %cst_58 : f32 to vector<8x32xf32>
      %c0_59 = arith.constant 0 : index
      %c0_60 = arith.constant 0 : index
      %111 = vector.load %arg8[%c0_59, %c0_60] : memref<8x32xf32, #tpu.memory_space<vmem>>, vector<8x32xf32>
      tpu.vector_store %arg8[%c0_59, %c0_60], %110 {strides = array<i32>} : memref<8x32xf32, #tpu.memory_space<vmem>>, vector<8x32xf32>,
      %cst_61 = arith.constant -1.000000e+30 : f32
      %112 = vector.broadcast %cst_61 : f32 to vector<8x32xf32>
      %c0_62 = arith.constant 0 : index
      %c0_63 = arith.constant 0 : index
      %113 = vector.load %arg9[%c0_62, %c0_63] : memref<8x32xf32, #tpu.memory_space<vmem>>, vector<8x32xf32>
      tpu.vector_store %arg9[%c0_62, %c0_63], %112 {strides = array<i32>} : memref<8x32xf32, #tpu.memory_space<vmem>>, vector<8x32xf32>,
      %cst_64 = arith.constant 0.000000e+00 : f32
      %114 = vector.broadcast %cst_64 : f32 to vector<8x1xf32>
      %c0_65 = arith.constant 0 : index
      %c0_66 = arith.constant 0 : index
      %115 = vector.load %arg10[%c0_65, %c0_66] : memref<8x1xf32, #tpu.memory_space<vmem>>, vector<8x1xf32>
      tpu.vector_store %arg10[%c0_65, %c0_66], %114 {strides = array<i32>} : memref<8x1xf32, #tpu.memory_space<vmem>>, vector<8x1xf32>,
      %cst_67 = arith.constant -1.000000e+30 : f32
      %116 = vector.broadcast %cst_67 : f32 to vector<1x1xf32>
      %c0_68 = arith.constant 0 : index
      %c0_69 = arith.constant 0 : index
      %117 = vector.load %arg11[%c0_68, %c0_69] : memref<1x1xf32, #tpu.memory_space<vmem>>, vector<1x1xf32>
      tpu.vector_store %arg11[%c0_68, %c0_69], %116 {strides = array<i32>} : memref<1x1xf32, #tpu.memory_space<vmem>>, vector<1x1xf32>,
      %cst_70 = arith.constant 0.000000e+00 : f32
      %118 = vector.broadcast %cst_70 : f32 to vector<1x1xf32>
      %c0_71 = arith.constant 0 : index
      %c0_72 = arith.constant 0 : index
      %119 = vector.load %arg12[%c0_71, %c0_72] : memref<1x1xf32, #tpu.memory_space<vmem>>, vector<1x1xf32>
      tpu.vector_store %arg12[%c0_71, %c0_72], %118 {strides = array<i32>} : memref<1x1xf32, #tpu.memory_space<vmem>>, vector<1x1xf32>,
    } else {
    }
    %c0 = arith.constant 0 : index
    %c0_1 = arith.constant 0 : index
    %3 = vector.load %arg1[%c0, %c0_1] : memref<128x33xf32, #tpu.memory_space<vmem>>, vector<128x33xf32>
    %4 = vector.extract_strided_slice %3 {offsets = [0, 0], sizes = [128, 32], strides = [1, 1]} : vector<128x33xf32> to vector<128x32xf32>
    %5 = vector.extract_strided_slice %3 {offsets = [0, 32], sizes = [128, 1], strides = [1, 1]} : vector<128x33xf32> to vector<128x1xf32>
    %c0_2 = arith.constant 0 : index
    %c0_3 = arith.constant 0 : index
    %6 = vector.load %arg2[%c0_2, %c0_3] : memref<1x128xi32, #tpu.memory_space<vmem>>, vector<1x128xi32>
    %c0_4 = arith.constant 0 : index
    %c0_5 = arith.constant 0 : index
    %7 = vector.load %arg4[%c0_4, %c0_5] : memref<8x32xf32, #tpu.memory_space<vmem>>, vector<1x16xf32>
    %c1 = arith.constant 1 : index
    %c0_6 = arith.constant 0 : index
    %8 = vector.load %arg4[%c1, %c0_6] : memref<8x32xf32, #tpu.memory_space<vmem>>, vector<1x16xf32>
    %c2 = arith.constant 2 : index
    %c0_7 = arith.constant 0 : index
    %9 = vector.load %arg4[%c2, %c0_7] : memref<8x32xf32, #tpu.memory_space<vmem>>, vector<1x1xf32>
    %c0_8 = arith.constant 0 : index
    %c0_9 = arith.constant 0 : index
    %10 = vector.load %arg3[%c0_8, %c0_9] : memref<32x16xf32, #tpu.memory_space<vmem>>, vector<32x16xf32>
    %cst = arith.constant dense<0.000000e+00> : vector<128x16xf32>
    %11 = tpu.matmul %4, %10, %cst {dimension_numbers = #tpu.dot_dimension_numbers<[1], [0], [0], [1], [0, 0, 1, 1], [], []>} : vector<128x32xf32>, vector<32x16xf32>, vector<128x16xf32> -> vector<128x16xf32>
    %12 = vector.broadcast %7 : vector<1x16xf32> to vector<128x16xf32>
    %13 = arith.addf %11, %12 : vector<128x16xf32>
    %14 = arith.negf %13 : vector<128x16xf32>
    %15 = math.exp %14 : vector<128x16xf32>
    %cst_10 = arith.constant 1.000000e+00 : f32
    %16 = vector.broadcast %cst_10 : f32 to vector<128x16xf32>
    %17 = arith.addf %16, %15 : vector<128x16xf32>
    %18 = arith.divf %16, %17 : vector<128x16xf32>
    %19 = arith.mulf %13, %18 : vector<128x16xf32>
    %20 = vector.broadcast %8 : vector<1x16xf32> to vector<128x16xf32>
    %21 = arith.mulf %19, %20 : vector<128x16xf32>
    %cst_11 = arith.constant dense<0.000000e+00> : vector<128xf32>
    %22 = vector.multi_reduction <add>, %21, %cst_11 [1] : vector<128x16xf32> to vector<128xf32>
    %23 = vector.shape_cast %22 : vector<128xf32> to vector<128x1xf32>
    %24 = vector.broadcast %9 : vector<1x1xf32> to vector<128x1xf32>
    %25 = arith.addf %23, %24 : vector<128x1xf32>
    %cst_12 = arith.constant 0.000000e+00 : f32
    %26 = vector.broadcast %cst_12 : f32 to vector<128x1xf32>
    %27 = arith.cmpf oge, %5, %26 : vector<128x1xf32>
    %cst_13 = arith.constant -1.000000e+30 : f32
    %28 = vector.broadcast %cst_13 : f32 to vector<128x1xf32>
    %29 = arith.select %27, %25, %28 : vector<128x1xi1>, vector<128x1xf32>
    %c0_14 = arith.constant 0 : index
    %c0_15 = arith.constant 0 : index
    %30 = vector.load %arg11[%c0_14, %c0_15] : memref<1x1xf32, #tpu.memory_space<vmem>>, vector<1x1xf32>
    %cst_16 = arith.constant dense<0xFF800000> : vector<1xf32>
    %31 = vector.multi_reduction <maximumf>, %29, %cst_16 [0] : vector<128x1xf32> to vector<1xf32>
    %32 = vector.shape_cast %31 : vector<1xf32> to vector<1x1xf32>
    %33 = arith.maximumf %30, %32 : vector<1x1xf32>
    %34 = arith.subf %30, %33 : vector<1x1xf32>
    %35 = math.exp %34 : vector<1x1xf32>
    %36 = vector.broadcast %33 : vector<1x1xf32> to vector<128x1xf32>
    %37 = arith.subf %29, %36 : vector<128x1xf32>
    %38 = math.exp %37 : vector<128x1xf32>
    %cst_17 = arith.constant 0.000000e+00 : f32
    %39 = vector.broadcast %cst_17 : f32 to vector<128x1xf32>
    %40 = arith.select %27, %38, %39 : vector<128x1xi1>, vector<128x1xf32>
    %c0_18 = arith.constant 0 : index
    %c0_19 = arith.constant 0 : index
    %41 = vector.load %arg12[%c0_18, %c0_19] : memref<1x1xf32, #tpu.memory_space<vmem>>, vector<1x1xf32>
    %42 = arith.mulf %35, %41 : vector<1x1xf32>
    %cst_20 = arith.constant dense<0.000000e+00> : vector<1xf32>
    %43 = vector.multi_reduction <add>, %40, %cst_20 [0] : vector<128x1xf32> to vector<1xf32>
    %44 = vector.shape_cast %43 : vector<1xf32> to vector<1x1xf32>
    %45 = arith.addf %42, %44 : vector<1x1xf32>
    %c0_21 = arith.constant 0 : index
    %c0_22 = arith.constant 0 : index
    %46 = vector.load %arg12[%c0_21, %c0_22] : memref<1x1xf32, #tpu.memory_space<vmem>>, vector<1x1xf32>
    tpu.vector_store %arg12[%c0_21, %c0_22], %45 {strides = array<i32>} : memref<1x1xf32, #tpu.memory_space<vmem>>, vector<1x1xf32>,
    %c0_23 = arith.constant 0 : index
    %c0_24 = arith.constant 0 : index
    %47 = vector.load %arg11[%c0_23, %c0_24] : memref<1x1xf32, #tpu.memory_space<vmem>>, vector<1x1xf32>
    tpu.vector_store %arg11[%c0_23, %c0_24], %33 {strides = array<i32>} : memref<1x1xf32, #tpu.memory_space<vmem>>, vector<1x1xf32>,
    %48 = tpu.iota {dimensions = array<i32: 0>} : vector<8x128xi32>
    %49 = vector.broadcast %6 : vector<1x128xi32> to vector<8x128xi32>
    %50 = arith.cmpi eq, %48, %49 : vector<8x128xi32>
    %c0_i32_25 = arith.constant 0 : i32
    %51 = vector.broadcast %c0_i32_25 : i32 to vector<1x128xi32>
    %52 = arith.cmpi sge, %6, %51 : vector<1x128xi32>
    %53 = vector.broadcast %52 : vector<1x128xi1> to vector<8x128xi1>
    %54 = arith.andi %50, %53 : vector<8x128xi1>
    %55 = arith.extui %54 : vector<8x128xi1> to vector<8x128xi32>
    %56 = arith.sitofp %55 : vector<8x128xi32> to vector<8x128xf32>
    %57 = vector.broadcast %40 : vector<128x1xf32> to vector<128x32xf32>
    %58 = arith.mulf %57, %4 : vector<128x32xf32>
    %cst_26 = arith.constant 1.000000e+00 : f32
    %59 = vector.broadcast %cst_26 : f32 to vector<128x1xf32>
    %60 = tpu.concatenate %4, %58, %59 in 1 : vector<128x32xf32>, vector<128x32xf32>, vector<128x1xf32> -> vector<128x65xf32>
    %cst_27 = arith.constant dense<0.000000e+00> : vector<8x65xf32>
    %61 = tpu.matmul %56, %60, %cst_27 {dimension_numbers = #tpu.dot_dimension_numbers<[1], [0], [0], [1], [0, 0, 1, 1], [], []>} : vector<8x128xf32>, vector<128x65xf32>, vector<8x65xf32> -> vector<8x65xf32>
    %c0_28 = arith.constant 0 : index
    %c0_29 = arith.constant 0 : index
    %62 = vector.load %arg7[%c0_28, %c0_29] : memref<8x32xf32, #tpu.memory_space<vmem>>, vector<8x32xf32>
    %63 = vector.extract_strided_slice %61 {offsets = [0, 0], sizes = [8, 32], strides = [1, 1]} : vector<8x65xf32> to vector<8x32xf32>
    %64 = arith.addf %62, %63 : vector<8x32xf32>
    %c0_30 = arith.constant 0 : index
    %c0_31 = arith.constant 0 : index
    %65 = vector.load %arg7[%c0_30, %c0_31] : memref<8x32xf32, #tpu.memory_space<vmem>>, vector<8x32xf32>
    tpu.vector_store %arg7[%c0_30, %c0_31], %64 {strides = array<i32>} : memref<8x32xf32, #tpu.memory_space<vmem>>, vector<8x32xf32>,
    %c0_32 = arith.constant 0 : index
    %c0_33 = arith.constant 0 : index
    %66 = vector.load %arg8[%c0_32, %c0_33] : memref<8x32xf32, #tpu.memory_space<vmem>>, vector<8x32xf32>
    %67 = vector.broadcast %35 : vector<1x1xf32> to vector<8x32xf32>
    %68 = arith.mulf %67, %66 : vector<8x32xf32>
    %69 = vector.extract_strided_slice %61 {offsets = [0, 32], sizes = [8, 32], strides = [1, 1]} : vector<8x65xf32> to vector<8x32xf32>
    %70 = arith.addf %68, %69 : vector<8x32xf32>
    %c0_34 = arith.constant 0 : index
    %c0_35 = arith.constant 0 : index
    %71 = vector.load %arg8[%c0_34, %c0_35] : memref<8x32xf32, #tpu.memory_space<vmem>>, vector<8x32xf32>
    tpu.vector_store %arg8[%c0_34, %c0_35], %70 {strides = array<i32>} : memref<8x32xf32, #tpu.memory_space<vmem>>, vector<8x32xf32>,
    %c0_36 = arith.constant 0 : index
    %c0_37 = arith.constant 0 : index
    %72 = vector.load %arg10[%c0_36, %c0_37] : memref<8x1xf32, #tpu.memory_space<vmem>>, vector<8x1xf32>
    %73 = vector.extract_strided_slice %61 {offsets = [0, 64], sizes = [8, 1], strides = [1, 1]} : vector<8x65xf32> to vector<8x1xf32>
    %74 = arith.addf %72, %73 : vector<8x1xf32>
    %c0_38 = arith.constant 0 : index
    %c0_39 = arith.constant 0 : index
    %75 = vector.load %arg10[%c0_38, %c0_39] : memref<8x1xf32, #tpu.memory_space<vmem>>, vector<8x1xf32>
    tpu.vector_store %arg10[%c0_38, %c0_39], %74 {strides = array<i32>} : memref<8x1xf32, #tpu.memory_space<vmem>>, vector<8x1xf32>,
    %cst_40 = arith.constant 0.000000e+00 : f32
    %76 = vector.broadcast %cst_40 : f32 to vector<128x1xf32>
    %77 = arith.cmpf oeq, %5, %76 : vector<128x1xf32>
    %cst_41 = arith.constant -1.000000e+30 : f32
    %78 = vector.shape_cast %77 : vector<128x1xi1> to vector<128x1xi1>
    %79 = vector.broadcast %78 : vector<128x1xi1> to vector<128x32xi1>
    %80 = vector.broadcast %cst_41 : f32 to vector<128x32xf32>
    %81 = arith.select %79, %4, %80 : vector<128x32xi1>, vector<128x32xf32>
    %cst_42 = arith.constant dense<0xFF800000> : vector<32xf32>
    %82 = vector.multi_reduction <maximumf>, %81, %cst_42 [0] : vector<128x32xf32> to vector<32xf32>
    %83 = vector.shape_cast %82 : vector<32xf32> to vector<1x32xf32>
    %cst_43 = arith.constant 1.000000e+00 : f32
    %84 = vector.broadcast %cst_43 : f32 to vector<128x1xf32>
    %85 = arith.cmpf oeq, %5, %84 : vector<128x1xf32>
    %cst_44 = arith.constant -1.000000e+30 : f32
    %86 = vector.shape_cast %85 : vector<128x1xi1> to vector<128x1xi1>
    %87 = vector.broadcast %86 : vector<128x1xi1> to vector<128x32xi1>
    %88 = vector.broadcast %cst_44 : f32 to vector<128x32xf32>
    %89 = arith.select %87, %4, %88 : vector<128x32xi1>, vector<128x32xf32>
    %cst_45 = arith.constant dense<0xFF800000> : vector<32xf32>
    %90 = vector.multi_reduction <maximumf>, %89, %cst_45 [0] : vector<128x32xf32> to vector<32xf32>
    %91 = vector.shape_cast %90 : vector<32xf32> to vector<1x32xf32>
    %cst_46 = arith.constant 2.000000e+00 : f32
    %92 = vector.broadcast %cst_46 : f32 to vector<128x1xf32>
    %93 = arith.cmpf oeq, %5, %92 : vector<128x1xf32>
    %cst_47 = arith.constant -1.000000e+30 : f32
    %94 = vector.shape_cast %93 : vector<128x1xi1> to vector<128x1xi1>
    %95 = vector.broadcast %94 : vector<128x1xi1> to vector<128x32xi1>
    %96 = vector.broadcast %cst_47 : f32 to vector<128x32xf32>
    %97 = arith.select %95, %4, %96 : vector<128x32xi1>, vector<128x32xf32>
    %cst_48 = arith.constant dense<0xFF800000> : vector<32xf32>
    %98 = vector.multi_reduction <maximumf>, %97, %cst_48 [0] : vector<128x32xf32> to vector<32xf32>
    %99 = vector.shape_cast %98 : vector<32xf32> to vector<1x32xf32>
    %cst_49 = arith.constant -1.000000e+30 : f32
    %100 = vector.broadcast %cst_49 : f32 to vector<5x32xf32>
    %101 = tpu.concatenate %83, %91, %99, %100 in 0 : vector<1x32xf32>, vector<1x32xf32>, vector<1x32xf32>, vector<5x32xf32> -> vector<8x32xf32>
    %c0_50 = arith.constant 0 : index
    %c0_51 = arith.constant 0 : index
    %102 = vector.load %arg9[%c0_50, %c0_51] : memref<8x32xf32, #tpu.memory_space<vmem>>, vector<8x32xf32>
    %103 = arith.maximumf %102, %101 : vector<8x32xf32>
    %c0_52 = arith.constant 0 : index
    %c0_53 = arith.constant 0 : index
    %104 = vector.load %arg9[%c0_52, %c0_53] : memref<8x32xf32, #tpu.memory_space<vmem>>, vector<8x32xf32>
    tpu.vector_store %arg9[%c0_52, %c0_53], %103 {strides = array<i32>} : memref<8x32xf32, #tpu.memory_space<vmem>>, vector<8x32xf32>,
    %c1_i32 = arith.constant 1 : i32
    %105 = arith.cmpi eq, %arg0, %c1_i32 : i32
    %106 = arith.extui %105 : i1 to i32
    %c0_i32_54 = arith.constant 0 : i32
    %107 = arith.cmpi ne, %106, %c0_i32_54 : i32
    scf.if %107 {
      %c0_55 = arith.constant 0 : index
      %c0_56 = arith.constant 0 : index
      %108 = vector.load %arg10[%c0_55, %c0_56] : memref<8x1xf32, #tpu.memory_space<vmem>>, vector<8x1xf32>
      %cst_57 = arith.constant 1.000000e+00 : f32
      %109 = vector.broadcast %cst_57 : f32 to vector<8x1xf32>
      %110 = arith.maximumf %108, %109 : vector<8x1xf32>
      %c0_58 = arith.constant 0 : index
      %c0_59 = arith.constant 0 : index
      %111 = vector.load %arg7[%c0_58, %c0_59] : memref<8x32xf32, #tpu.memory_space<vmem>>, vector<8x32xf32>
      %112 = vector.broadcast %110 : vector<8x1xf32> to vector<8x32xf32>
      %113 = arith.divf %111, %112 : vector<8x32xf32>
      %c0_60 = arith.constant 0 : index
      %c0_61 = arith.constant 0 : index
      %114 = vector.load %arg8[%c0_60, %c0_61] : memref<8x32xf32, #tpu.memory_space<vmem>>, vector<8x32xf32>
      %c0_62 = arith.constant 0 : index
      %c0_63 = arith.constant 0 : index
      %115 = vector.load %arg12[%c0_62, %c0_63] : memref<1x1xf32, #tpu.memory_space<vmem>>, vector<1x1xf32>
      %cst_64 = arith.constant 1.000000e-30 : f32
      %116 = vector.broadcast %cst_64 : f32 to vector<1x1xf32>
      %117 = arith.maximumf %115, %116 : vector<1x1xf32>
      %118 = vector.broadcast %117 : vector<1x1xf32> to vector<8x32xf32>
      %119 = arith.divf %114, %118 : vector<8x32xf32>
      %c0_65 = arith.constant 0 : index
      %c0_66 = arith.constant 0 : index
      %120 = vector.load %arg9[%c0_65, %c0_66] : memref<8x32xf32, #tpu.memory_space<vmem>>, vector<8x32xf32>
      %c0_67 = arith.constant 0 : index
      %c0_68 = arith.constant 0 : index
      %121 = vector.load %arg5[%c0_67, %c0_68] : memref<96x32xf32, #tpu.memory_space<vmem>>, vector<96x32xf32>
      %122 = vector.extract_strided_slice %121 {offsets = [0, 0], sizes = [32, 32], strides = [1, 1]} : vector<96x32xf32> to vector<32x32xf32>
      %cst_69 = arith.constant dense<0.000000e+00> : vector<8x32xf32>
      %123 = tpu.matmul %113, %122, %cst_69 {dimension_numbers = #tpu.dot_dimension_numbers<[1], [0], [0], [1], [0, 0, 1, 1], [], []>} : vector<8x32xf32>, vector<32x32xf32>, vector<8x32xf32> -> vector<8x32xf32>
      %124 = vector.extract_strided_slice %121 {offsets = [32, 0], sizes = [32, 32], strides = [1, 1]} : vector<96x32xf32> to vector<32x32xf32>
      %cst_70 = arith.constant dense<0.000000e+00> : vector<8x32xf32>
      %125 = tpu.matmul %120, %124, %cst_70 {dimension_numbers = #tpu.dot_dimension_numbers<[1], [0], [0], [1], [0, 0, 1, 1], [], []>} : vector<8x32xf32>, vector<32x32xf32>, vector<8x32xf32> -> vector<8x32xf32>
      %126 = arith.addf %123, %125 : vector<8x32xf32>
      %127 = vector.extract_strided_slice %121 {offsets = [64, 0], sizes = [32, 32], strides = [1, 1]} : vector<96x32xf32> to vector<32x32xf32>
      %cst_71 = arith.constant dense<0.000000e+00> : vector<8x32xf32>
      %128 = tpu.matmul %119, %127, %cst_71 {dimension_numbers = #tpu.dot_dimension_numbers<[1], [0], [0], [1], [0, 0, 1, 1], [], []>} : vector<8x32xf32>, vector<32x32xf32>, vector<8x32xf32> -> vector<8x32xf32>
      %129 = arith.addf %126, %128 : vector<8x32xf32>
      %c3 = arith.constant 3 : index
      %c0_72 = arith.constant 0 : index
      %130 = vector.load %arg4[%c3, %c0_72] : memref<8x32xf32, #tpu.memory_space<vmem>>, vector<1x32xf32>
      %131 = vector.broadcast %130 : vector<1x32xf32> to vector<8x32xf32>
      %132 = arith.addf %129, %131 : vector<8x32xf32>
      %cst_73 = arith.constant dense<0.000000e+00> : vector<8xf32>
      %133 = vector.multi_reduction <add>, %132, %cst_73 [1] : vector<8x32xf32> to vector<8xf32>
      %134 = vector.shape_cast %133 : vector<8xf32> to vector<8x1xf32>
      %cst_74 = arith.constant 3.200000e+01 : f32
      %135 = vector.broadcast %cst_74 : f32 to vector<8x1xf32>
      %136 = arith.divf %134, %135 : vector<8x1xf32>
      %137 = vector.broadcast %136 : vector<8x1xf32> to vector<8x32xf32>
      %138 = arith.subf %132, %137 : vector<8x32xf32>
      %139 = arith.mulf %138, %138 : vector<8x32xf32>
      %cst_75 = arith.constant dense<0.000000e+00> : vector<8xf32>
      %140 = vector.multi_reduction <add>, %139, %cst_75 [1] : vector<8x32xf32> to vector<8xf32>
      %141 = vector.shape_cast %140 : vector<8xf32> to vector<8x1xf32>
      %cst_76 = arith.constant 3.200000e+01 : f32
      %142 = vector.broadcast %cst_76 : f32 to vector<8x1xf32>
      %143 = arith.divf %141, %142 : vector<8x1xf32>
      %144 = vector.broadcast %136 : vector<8x1xf32> to vector<8x32xf32>
      %145 = arith.subf %132, %144 : vector<8x32xf32>
      %cst_77 = arith.constant 9.99999974E-6 : f32
      %146 = vector.broadcast %cst_77 : f32 to vector<8x1xf32>
      %147 = arith.addf %143, %146 : vector<8x1xf32>
      %148 = math.rsqrt %147 : vector<8x1xf32>
      %149 = vector.broadcast %148 : vector<8x1xf32> to vector<8x32xf32>
      %150 = arith.mulf %145, %149 : vector<8x32xf32>
      %c4 = arith.constant 4 : index
      %c0_78 = arith.constant 0 : index
      %151 = vector.load %arg4[%c4, %c0_78] : memref<8x32xf32, #tpu.memory_space<vmem>>, vector<1x32xf32>
      %152 = vector.broadcast %151 : vector<1x32xf32> to vector<8x32xf32>
      %153 = arith.mulf %150, %152 : vector<8x32xf32>
      %c5 = arith.constant 5 : index
      %c0_79 = arith.constant 0 : index
      %154 = vector.load %arg4[%c5, %c0_79] : memref<8x32xf32, #tpu.memory_space<vmem>>, vector<1x32xf32>
      %155 = vector.broadcast %154 : vector<1x32xf32> to vector<8x32xf32>
      %156 = arith.addf %153, %155 : vector<8x32xf32>
      %157 = arith.negf %156 : vector<8x32xf32>
      %158 = math.exp %157 : vector<8x32xf32>
      %cst_80 = arith.constant 1.000000e+00 : f32
      %159 = vector.broadcast %cst_80 : f32 to vector<8x32xf32>
      %160 = arith.addf %159, %158 : vector<8x32xf32>
      %161 = arith.divf %159, %160 : vector<8x32xf32>
      %162 = arith.mulf %156, %161 : vector<8x32xf32>
      %c0_81 = arith.constant 0 : index
      %c0_82 = arith.constant 0 : index
      %163 = vector.load %arg6[%c0_81, %c0_82] : memref<8x32xf32, #tpu.memory_space<vmem>>, vector<8x32xf32>
      tpu.vector_store %arg6[%c0_81, %c0_82], %162 {strides = array<i32>} : memref<8x32xf32, #tpu.memory_space<vmem>>, vector<8x32xf32>,
    } else {
    }
    return
  }
  func.func @transform_0(%arg0: i32) -> (i32, i32) {
    %c0_i32 = arith.constant 0 : i32
    %c0_i32_0 = arith.constant 0 : i32
    return %arg0, %c0_i32 : i32, i32
  }
  func.func @transform_1(%arg0: i32) -> (i32, i32) {
    %c0_i32 = arith.constant 0 : i32
    %c0_i32_0 = arith.constant 0 : i32
    return %c0_i32, %arg0 : i32, i32
  }
  func.func @transform_2(%arg0: i32) -> (i32, i32) {
    %c0_i32 = arith.constant 0 : i32
    %c0_i32_0 = arith.constant 0 : i32
    %c0_i32_1 = arith.constant 0 : i32
    return %c0_i32, %c0_i32_0 : i32, i32
  }
  func.func @transform_3(%arg0: i32) -> (i32, i32) {
    %c0_i32 = arith.constant 0 : i32
    %c0_i32_0 = arith.constant 0 : i32
    %c0_i32_1 = arith.constant 0 : i32
    return %c0_i32, %c0_i32_0 : i32, i32
  }
  func.func @transform_4(%arg0: i32) -> (i32, i32) {
    %c0_i32 = arith.constant 0 : i32
    %c0_i32_0 = arith.constant 0 : i32
    %c0_i32_1 = arith.constant 0 : i32
    return %c0_i32, %c0_i32_0 : i32, i32
  }
  func.func @transform_5(%arg0: i32) -> (i32, i32) {
    %c0_i32 = arith.constant 0 : i32
    %c0_i32_0 = arith.constant 0 : i32
    %c0_i32_1 = arith.constant 0 : i32
    return %c0_i32, %c0_i32_0 : i32, i32
  }
}

</mosaic_0001>

<llo_original>
// kernel: tpu_custom_call.1
$region0: #{tpu_custom_call.1}
  #allocation0 [shape = 'u32[]', space=smem, size = 0x4, offset = 0x4, fixed_abs, tag = 'smem constant byte address 0x4 - core index']
  #allocation1 [shape = 'u32[144,128]{1,0:T(1,128)}', space=vmem, size = 0x12000, scoped, tag = 'internal scratch']
  #allocation2 [shape = 'f32[8,32]{1,0:T(8,128)}', space=vmem, size = 0x1000, scoped, tag = 'scratch operand']
  #allocation3 [shape = 'f32[8,32]{1,0:T(8,128)}', space=vmem, size = 0x1000, scoped, tag = 'scratch operand']
  #allocation4 [shape = 'f32[8,32]{1,0:T(8,128)}', space=vmem, size = 0x1000, scoped, tag = 'scratch operand']
  #allocation5 [shape = 'f32[8,1]{1,0:T(8,128)}', space=vmem, size = 0x1000, scoped, tag = 'scratch operand']
  #allocation6 [shape = 'f32[1,1]{1,0:T(1,128)}', space=vmem, size = 0x200, scoped, tag = 'scratch operand']
  #allocation7 [shape = 'f32[1,1]{1,0:T(1,128)}', space=vmem, size = 0x200, scoped, tag = 'scratch operand']
  %s0 = inlined_call_operand.vmem [shape: f32[256,33], index: 0, kind: input, shape index: {}]
  %s1 = inlined_call_operand.vmem [shape: s32[1,256], index: 1, kind: input, shape index: {}]
  %s2 = inlined_call_operand.vmem [shape: f32[32,16], index: 2, kind: input, shape index: {}]
  %s3 = inlined_call_operand.vmem [shape: f32[8,32], index: 3, kind: input, shape index: {}]
  %s4 = inlined_call_operand.vmem [shape: f32[96,32], index: 4, kind: input, shape index: {}]
  %s5 = inlined_call_operand.hbm [shape: f32[8,32], index: 5, kind: output, shape index: {}]
  %s6 = sld [smem:[#allocation0]]
  $region61: #{tpu_custom_call.1} parent=0
    _
  %s8 = ssub.s32 1, %s6
  %s9 = scalar_select 0, %s8, %s6
  $region1: #{tpu_custom_call.1} parent=0
    #allocation8 [shape = 'u8[4096]{0}', space=vmem, size = 0x1000, scoped, tag = 'output window, operand 0, single buffered']
    #allocation9 [shape = 's32[2]{0}', space=sflag, size = 0x8, scoped, tag = 'scoped memory for tpu_custom_call.1']
    %10 = vsyncpa [#allocation9], 0
    loop: start=0, step=1, limit=4
    $region2: #{tpu_custom_call.1} parent=1 // loop_pre_header
      _
    $region3: #{tpu_custom_call.1} parent=1 // loop_header
      %s12 = sphi 0, %s16
      %p13 = scmp.ge.s32.totalorder %s12, 4
      %s22 = sphi 0, %s24
      %s25 = sphi 0, %s22
      %s26 = sphi 0, %s25
      %s42 = sphi 0, %s26
      %s48 = sphi 0, %s50
      %s51 = sphi 0, %s48
      %s52 = sphi 0, %s51
      %s68 = sphi 0, %s52
      %s72 = sphi 0, %s72
      %s74 = sphi 0, %s72
      %s75 = sphi 0, %s74
      %s89 = sphi 0, %s75
      %s93 = sphi 0, %s93
      %s95 = sphi 0, %s93
      %s96 = sphi 0, %s95
      %s110 = sphi 0, %s96
      %s114 = sphi 0, %s114
      %s116 = sphi 0, %s114
      %s117 = sphi 0, %s116
      %s131 = sphi 0, %s117
      %s135 = sphi 0, %s135
      %s137 = sphi 0, %s135
      %s138 = sphi 0, %s137
      %s152 = sphi 0, %s138
    $region4: #{tpu_custom_call.1} parent=1 // loop_header_branch
      %15 = sbr.rel (%p13) target = $region8
    $region5: #{tpu_custom_call.1} parent=1 // loop_body
      %s17 = ssub.s32 %s12, 1
      %s18 = ssub.s32 %s12, 2
      %s19 = sadd.s32 %s12, 1
      %s20 = ssub.s32 %s12, %s19
      %p21 = scmp.eq.s32.totalorder %s20, 0
      %s23 = sadd.s32 %s22, 1
      %s24 = scalar_select %p21, %s22, %s23
      %p27 = pneg %p21
      %p28 = scmp.eq.s32.totalorder %s12, 1
      %p29 = por %p27, %p28
      %p30 = scmp.ne.s32.totalorder %s22, %s25
      %p31 = scmp.eq.s32.totalorder %s12, 0
      %p32 = por %p30, %p31
      %p33 = scmp.ne.s32.totalorder %s22, %s25
      %p34 = scmp.eq.s32.totalorder %s17, 1
      %p35 = por %p33, %p34
      %p36 = scmp.ne.s32.totalorder %s25, %s26
      %p37 = scmp.eq.s32.totalorder %s17, 0
      %p38 = por %p36, %p37
      %p39 = scmp.ne.s32.totalorder %s25, %s26
      %p40 = scmp.eq.s32.totalorder %s18, 1
      %p41 = por %p39, %p40
      %p43 = scmp.ne.s32.totalorder %s26, %s42
      %p44 = scmp.eq.s32.totalorder %s18, 0
      %p45 = por %p43, %p44
      %s46 = ssub.s32 %s12, %s19
      %p47 = scmp.eq.s32.totalorder %s46, 0
      %s49 = sadd.s32 %s48, 1
      %s50 = scalar_select %p47, %s48, %s49
      %p53 = pneg %p47
      %p54 = scmp.eq.s32.totalorder %s12, 1
      %p55 = por %p53, %p54
      %p56 = scmp.ne.s32.totalorder %s48, %s51
      %p57 = scmp.eq.s32.totalorder %s12, 0
      %p58 = por %p56, %p57
      %p59 = scmp.ne.s32.totalorder %s48, %s51
      %p60 = scmp.eq.s32.totalorder %s17, 1
      %p61 = por %p59, %p60
      %p62 = scmp.ne.s32.totalorder %s51, %s52
      %p63 = scmp.eq.s32.totalorder %s17, 0
      %p64 = por %p62, %p63
      %p65 = scmp.ne.s32.totalorder %s51, %s52
      %p66 = scmp.eq.s32.totalorder %s18, 1
      %p67 = por %p65, %p66
      %p69 = scmp.ne.s32.totalorder %s52, %s68
      %p70 = scmp.eq.s32.totalorder %s18, 0
      %p71 = por %p69, %p70
      %s73 = sadd.s32 %s72, 1
      %p76 = scmp.eq.s32.totalorder %s12, 1
      %p77 = scmp.ne.s32.totalorder %s72, %s74
      %p78 = scmp.eq.s32.totalorder %s12, 0
      %p79 = por %p77, %p78
      %p80 = scmp.ne.s32.totalorder %s72, %s74
      %p81 = scmp.eq.s32.totalorder %s17, 1
      %p82 = por %p80, %p81
      %p83 = scmp.ne.s32.totalorder %s74, %s75
      %p84 = scmp.eq.s32.totalorder %s17, 0
      %p85 = por %p83, %p84
      %p86 = scmp.ne.s32.totalorder %s74, %s75
      %p87 = scmp.eq.s32.totalorder %s18, 1
      %p88 = por %p86, %p87
      %p90 = scmp.ne.s32.totalorder %s75, %s89
      %p91 = scmp.eq.s32.totalorder %s18, 0
      %p92 = por %p90, %p91
      %s94 = sadd.s32 %s93, 1
      %p97 = scmp.eq.s32.totalorder %s12, 1
      %p98 = scmp.ne.s32.totalorder %s93, %s95
      %p99 = scmp.eq.s32.totalorder %s12, 0
      %p100 = por %p98, %p99
      %p101 = scmp.ne.s32.totalorder %s93, %s95
      %p102 = scmp.eq.s32.totalorder %s17, 1
      %p103 = por %p101, %p102
      %p104 = scmp.ne.s32.totalorder %s95, %s96
      %p105 = scmp.eq.s32.totalorder %s17, 0
      %p106 = por %p104, %p105
      %p107 = scmp.ne.s32.totalorder %s95, %s96
      %p108 = scmp.eq.s32.totalorder %s18, 1
      %p109 = por %p107, %p108
      %p111 = scmp.ne.s32.totalorder %s96, %s110
      %p112 = scmp.eq.s32.totalorder %s18, 0
      %p113 = por %p111, %p112
      %s115 = sadd.s32 %s114, 1
      %p118 = scmp.eq.s32.totalorder %s12, 1
      %p119 = scmp.ne.s32.totalorder %s114, %s116
      %p120 = scmp.eq.s32.totalorder %s12, 0
      %p121 = por %p119, %p120
      %p122 = scmp.ne.s32.totalorder %s114, %s116
      %p123 = scmp.eq.s32.totalorder %s17, 1
      %p124 = por %p122, %p123
      %p125 = scmp.ne.s32.totalorder %s116, %s117
      %p126 = scmp.eq.s32.totalorder %s17, 0
      %p127 = por %p125, %p126
      %p128 = scmp.ne.s32.totalorder %s116, %s117
      %p129 = scmp.eq.s32.totalorder %s18, 1
      %p130 = por %p128, %p129
      %p132 = scmp.ne.s32.totalorder %s117, %s131
      %p133 = scmp.eq.s32.totalorder %s18, 0
      %p134 = por %p132, %p133
      %s136 = sadd.s32 %s135, 1
      %p139 = scmp.eq.s32.totalorder %s12, 1
      %p140 = scmp.ne.s32.totalorder %s135, %s137
      %p141 = scmp.eq.s32.totalorder %s12, 0
      %p142 = por %p140, %p141
      %p143 = scmp.ne.s32.totalorder %s135, %s137
      %p144 = scmp.eq.s32.totalorder %s17, 1
      %p145 = por %p143, %p144
      %p146 = scmp.ne.s32.totalorder %s137, %s138
      %p147 = scmp.eq.s32.totalorder %s17, 0
      %p148 = por %p146, %p147
      %p149 = scmp.ne.s32.totalorder %s137, %s138
      %p150 = scmp.eq.s32.totalorder %s18, 1
      %p151 = por %p149, %p150
      %p153 = scmp.ne.s32.totalorder %s138, %s152
      %p154 = scmp.eq.s32.totalorder %s18, 0
      %p155 = por %p153, %p154
      %p156 = scmp.le.s32.totalorder 1, %s12
      %p157 = scmp.lt.s32.totalorder %s12, 3
      %p158 = pnand %p156, %p157
      %p159 = pneg %p158
      // Predicated region
      $region9: #{tpu_custom_call.1} parent=5 // pred_check
        _
      $region10: #{tpu_custom_call.1} parent=5 // pred_check_branch
        %161 = sbr.rel (%p158) target = $region12
      $region11: #{tpu_custom_call.1} parent=5 // pred_region
        %s162 = ssub.s32 %s12, 1
        // Predicated region
        $region13: #{tpu_custom_call.1} parent=11 // pred_check
          %p163 = pneg %p85
        $region14: #{tpu_custom_call.1} parent=11 // pred_check_branch
          %165 = sbr.rel (%p163) target = $region16
        $region15: #{tpu_custom_call.1} parent=11 // pred_region
          _
        $region16: #{tpu_custom_call.1} parent=11 // pred_fallthru
          _
        // Predicated region
        $region17: #{tpu_custom_call.1} parent=11 // pred_check
          %p166 = pneg %p106
        $region18: #{tpu_custom_call.1} parent=11 // pred_check_branch
          %168 = sbr.rel (%p166) target = $region20
        $region19: #{tpu_custom_call.1} parent=11 // pred_region
          _
        $region20: #{tpu_custom_call.1} parent=11 // pred_fallthru
          _
        // Predicated region
        $region21: #{tpu_custom_call.1} parent=11 // pred_check
          %p169 = pneg %p127
        $region22: #{tpu_custom_call.1} parent=11 // pred_check_branch
          %171 = sbr.rel (%p169) target = $region24
        $region23: #{tpu_custom_call.1} parent=11 // pred_region
          _
        $region24: #{tpu_custom_call.1} parent=11 // pred_fallthru
          _
      $region12: #{tpu_custom_call.1} parent=5 // pred_fallthru
        _
      %p172 = scmp.lt.s32.totalorder %s12, 2
      // Predicated region
      $region25: #{tpu_custom_call.1} parent=5 // pred_check
        %p173 = pneg %p172
      $region26: #{tpu_custom_call.1} parent=5 // pred_check_branch
        %175 = sbr.rel (%p173) target = $region28
      $region27: #{tpu_custom_call.1} parent=5 // pred_region
        // Predicated region
        $region29: #{tpu_custom_call.1} parent=27 // pred_check
          %p176 = pneg %p32
        $region30: #{tpu_custom_call.1} parent=27 // pred_check_branch
          %178 = sbr.rel (%p176) target = $region32
        $region31: #{tpu_custom_call.1} parent=27 // pred_region
          %s179 = smul.u32 16, %s12
          %p180 = scmp.lt.s32.totalorder %s179, 31
          %s181 = scalar_select %p180, %s179, 31
          %s182 = smul.addr %s181, 8
          %s183 = scalar_lea.vmem %s0, %s182
          %s184 = smul.u32 16, %s12
        $region32: #{tpu_custom_call.1} parent=27 // pred_fallthru
          _
        // Predicated region
        $region33: #{tpu_custom_call.1} parent=27 // pred_check
          %p185 = pneg %p58
        $region34: #{tpu_custom_call.1} parent=27 // pred_check_branch
          %187 = sbr.rel (%p185) target = $region36
        $region35: #{tpu_custom_call.1} parent=27 // pred_region
          %p188 = scmp.lt.s32.totalorder %s12, 1
          %s189 = scalar_select %p188, %s12, 1
          %s190 = scalar_lea.vmem %s1, %s189
        $region36: #{tpu_custom_call.1} parent=27 // pred_fallthru
          _
      $region28: #{tpu_custom_call.1} parent=5 // pred_fallthru
        _
      %p191 = scmp.le.s32.totalorder 1, %s12
      %p192 = scmp.lt.s32.totalorder %s12, 3
      %p193 = pnand %p191, %p192
      %p194 = pneg %p193
      // Predicated region
      $region37: #{tpu_custom_call.1} parent=5 // pred_check
        _
      $region38: #{tpu_custom_call.1} parent=5 // pred_check_branch
        %196 = sbr.rel (%p193) target = $region40
      $region39: #{tpu_custom_call.1} parent=5 // pred_region
        %s197 = ssub.s32 %s12, 1
        %s198 = smul.u32 16, %s17
        %p199 = scmp.lt.s32.totalorder %s198, 31
        %s200 = scalar_select %p199, %s198, 31
        %s201 = smul.addr %s200, 8
        %s202 = scalar_lea.vmem %s0, %s201
        %p203 = pneg %p38
        %p204 = pneg %p35
        %p205 = scmp.lt.s32.totalorder %s17, 1
        %s206 = scalar_select %p205, %s17, 1
        %s207 = scalar_lea.vmem %s1, %s206
        %p208 = pneg %p64
        %p209 = pneg %p61
        %p210 = pneg %p85
        %p211 = pneg %p82
        %p212 = pneg %p106
        %p213 = pneg %p103
        %p214 = pneg %p127
        %p215 = pneg %p124
        %p216 = pneg %p148
        %p217 = pneg %p145
        %s218 = smul.u32 16, %s17
        %p219 = scmp.lt.s32.totalorder %s218, 31
        %s220 = scalar_select %p219, %s218, 31
        %s221 = smul.addr %s220, 8
        %s222 = scalar_lea.vmem %s0, %s221
        %s223 = smul.u32 16, %s17
        %p224 = scmp.lt.s32.totalorder %s17, 1
        %s225 = scalar_select %p224, %s17, 1
        %s226 = scalar_lea.vmem %s1, %s225
        %p227 = scmp.eq.s32.totalorder %s17, 0
        // Predicated region
        $region41: #{tpu_custom_call.1} parent=39 // pred_check
          %p228 = pneg %p227
        $region42: #{tpu_custom_call.1} parent=39 // pred_check_branch
          %230 = sbr.rel (%p228) target = $region44
        $region43: #{tpu_custom_call.1} parent=39 // pred_region
          %vm231 = vcmask 261120
          %232 = vst.msk [vmem:[#allocation2] sm:$0xff] %vm231, 0.0
          %233 = vst.msk [vmem:[#allocation3] sm:$0xff] %vm231, 0.0
          %234 = vst.msk [vmem:[#allocation4] sm:$0xff] %vm231, -1e+30
          %vm235 = vcmask 7168
          %236 = vst.msk [vmem:[#allocation5] sm:$0xff] %vm235, 0.0
          %vm237 = vcmask 0
          %238 = vst.msk [vmem:[#allocation6] sm:$0x1] %vm237, -1e+30
          %239 = vst.msk [vmem:[#allocation7] sm:$0x1] %vm237, 0.0
        $region44: #{tpu_custom_call.1} parent=39 // pred_fallthru
          _
        %v240 = vld [vmem:[%s222] sm:$0xff]
        %v241 = vld [vmem:[%s222 + $0x8] sm:$0xff]
        %v242 = vld [vmem:[%s222 + $0x10] sm:$0xff]
        %v243 = vld [vmem:[%s222 + $0x18] sm:$0xff]
        %v244 = vld [vmem:[%s222 + $0x20] sm:$0xff]
        %v245 = vld [vmem:[%s222 + $0x28] sm:$0xff]
        %v246 = vld [vmem:[%s222 + $0x30] sm:$0xff]
        %v247 = vld [vmem:[%s222 + $0x38] sm:$0xff]
        %v248 = vld [vmem:[%s222 + $0x40] sm:$0xff]
        %v249 = vld [vmem:[%s222 + $0x48] sm:$0xff]
        %v250 = vld [vmem:[%s222 + $0x50] sm:$0xff]
        %v251 = vld [vmem:[%s222 + $0x58] sm:$0xff]
        %v252 = vld [vmem:[%s222 + $0x60] sm:$0xff]
        %v253 = vld [vmem:[%s222 + $0x68] sm:$0xff]
        %v254 = vld [vmem:[%s222 + $0x70] sm:$0xff]
        %v255 = vld [vmem:[%s222 + $0x78] sm:$0xff]
        %v256 = vld [vmem:[%s226] sm:$0x1]
        %v257 = vld [vmem:[%s3] sm:$0x1]
        %v258 = vld [vmem:[%s3 + $0x1] sm:$0x1]
        %v259 = vld [vmem:[%s3 + $0x2] sm:$0x1]
        %v260 = vld [vmem:[%s2] sm:$0xff]
        %v261 = vld [vmem:[%s2 + $0x8] sm:$0xff]
        %v262 = vld [vmem:[%s2 + $0x10] sm:$0xff]
        %v263 = vld [vmem:[%s2 + $0x18] sm:$0xff]
        %v264 = vlaneseq
        %v265 = vshrl.u32 %v264, 7
        %v266 = vsub.s32 0, %v265
        %v267 = vrot.slane %v257, %v266
        %vm268 = vcmask 261120
        %v270 = vsel %vm268, %v240, 0
        %v273 = vsel %vm268, %v241, 0
        %v276 = vsel %vm268, %v242, 0
        %v279 = vsel %vm268, %v243, 0
        %v282 = vsel %vm268, %v244, 0
        %v285 = vsel %vm268, %v245, 0
        %v288 = vsel %vm268, %v246, 0
        %v291 = vsel %vm268, %v247, 0
        %v294 = vsel %vm268, %v248, 0
        %v297 = vsel %vm268, %v249, 0
        %v300 = vsel %vm268, %v250, 0
        %v303 = vsel %vm268, %v251, 0
        %v306 = vsel %vm268, %v252, 0
        %v309 = vsel %vm268, %v253, 0
        %v312 = vsel %vm268, %v254, 0
        %v315 = vsel %vm268, %v255, 0
        %317 = vmatprep.subr.mxu0 0.0
        %318 = vmatpush1.msra.mxu0 %v260
        %319 = vmatprep.subr.mxu0 0.0
        %320 = vmatpush1.msra.mxu0 %v261
        %321 = vmatprep.subr.mxu0 0.0
        %322 = vmatpush1.msra.mxu0 %v262
        %323 = vmatprep.subr.mxu0 0.0
        %324 = vmatpush1.msra.mxu0 %v263
        %325 = vmatprep.subr.mxu0 0.0
        %326 = vmatpush1.msra.mxu0 0.0
        %327 = vmatprep.subr.mxu0 0.0
        %328 = vmatpush1.msra.mxu0 0.0
        %329 = vmatprep.subr.mxu0 0.0
        %330 = vmatpush1.msra.mxu0 0.0
        %331 = vmatprep.subr.mxu0 0.0
        %332 = vmatpush1.msra.mxu0 0.0
        %333 = vmatprep.subr.mxu0 0.0
        %334 = vmatpush1.msra.mxu0 0.0
        %335 = vmatprep.subr.mxu0 0.0
        %336 = vmatpush1.msra.mxu0 0.0
        %337 = vmatprep.subr.mxu0 0.0
        %338 = vmatpush1.msra.mxu0 0.0
        %339 = vmatprep.subr.mxu0 0.0
        %340 = vmatpush1.msra.mxu0 0.0
        %341 = vmatprep.subr.mxu0 0.0
        %342 = vmatpush1.msra.mxu0 0.0
        %343 = vmatprep.subr.mxu0 0.0
        %344 = vmatpush1.msra.mxu0 0.0
        %345 = vmatprep.subr.mxu0 0.0
        %346 = vmatpush1.msra.mxu0 0.0
        %347 = vmatprep.subr.mxu0 0.0
        %348 = vmatpush1.msra.mxu0 0.0
        %349 = vmatprep.subr.mxu0 0.0
        %350 = vmatpush1.msra.mxu0 0.0
        %351 = vmatprep.subr.mxu0 0.0
        %352 = vmatpush1.msra.mxu0 0.0
        %353 = vmatprep.subr.mxu0 0.0
        %354 = vmatpush1.msra.mxu0 0.0
        %355 = vmatprep.subr.mxu0 0.0
        %356 = vmatpush1.msra.mxu0 0.0
        %357 = vmatprep.subr.mxu0 0.0
        %358 = vmatpush1.msra.mxu0 0.0
        %359 = vmatprep.subr.mxu0 0.0
        %360 = vmatpush1.msra.mxu0 0.0
        %361 = vmatprep.subr.mxu0 0.0
        %362 = vmatpush1.msra.mxu0 0.0
        %363 = vmatprep.subr.mxu0 0.0
        %364 = vmatpush1.msra.mxu0 0.0
        %365 = vmatprep.subr.mxu0 0.0
        %366 = vmatpush1.msra.mxu0 0.0
        %367 = vmatprep.subr.mxu0 0.0
        %368 = vmatpush1.msra.mxu0 0.0
        %369 = vmatprep.subr.mxu0 0.0
        %370 = vmatpush1.msra.mxu0 0.0
        %371 = vmatprep.subr.mxu0 0.0
        %372 = vmatpush1.msra.mxu0 0.0
        %373 = vmatprep.subr.mxu0 0.0
        %374 = vmatpush1.msra.mxu0 0.0
        %375 = vmatprep.subr.mxu0 0.0
        %376 = vmatpush1.msra.mxu0 0.0
        %377 = vmatprep.subr.mxu0 0.0
        %378 = vmatpush1.msra.mxu0 0.0
        %379 = vmatprep.subr.mxu0 0.0
        %380 = vmatpush1.msra.mxu0 0.0
        %381 = vmatprep.mubr.f32.mxu0 0.0
        %382 = vmatmul.mubr.f32.gmra.mrb[0].mxu0 %v270
        %v383 = vpop.f32.mrb[0].mxu0
        %v384 = vadd.f32 %v267, %v383
        %v385 = vpop.f32.mrb[0].mxu0
        %386 = vmatprep.mubr.f32.mxu0 0.0
        %387 = vmatmul.mubr.f32.gmra.mrb[0].mxu0 %v273
        %v388 = vpop.f32.mrb[0].mxu0
        %v389 = vadd.f32 %v267, %v388
        %v390 = vpop.f32.mrb[0].mxu0
        %391 = vmatprep.mubr.f32.mxu0 0.0
        %392 = vmatmul.mubr.f32.gmra.mrb[0].mxu0 %v276
        %v393 = vpop.f32.mrb[0].mxu0
        %v394 = vadd.f32 %v267, %v393
        %v395 = vpop.f32.mrb[0].mxu0
        %396 = vmatprep.mubr.f32.mxu0 0.0
        %397 = vmatmul.mubr.f32.gmra.mrb[0].mxu0 %v279
        %v398 = vpop.f32.mrb[0].mxu0
        %v399 = vadd.f32 %v267, %v398
        %v400 = vpop.f32.mrb[0].mxu0
        %401 = vmatprep.mubr.f32.mxu0 0.0
        %402 = vmatmul.mubr.f32.gmra.mrb[0].mxu0 %v282
        %v403 = vpop.f32.mrb[0].mxu0
        %v404 = vadd.f32 %v267, %v403
        %v405 = vpop.f32.mrb[0].mxu0
        %406 = vmatprep.mubr.f32.mxu0 0.0
        %407 = vmatmul.mubr.f32.gmra.mrb[0].mxu0 %v285
        %v408 = vpop.f32.mrb[0].mxu0
        %v409 = vadd.f32 %v267, %v408
        %v410 = vpop.f32.mrb[0].mxu0
        %411 = vmatprep.mubr.f32.mxu0 0.0
        %412 = vmatmul.mubr.f32.gmra.mrb[0].mxu0 %v288
        %v413 = vpop.f32.mrb[0].mxu0
        %v414 = vadd.f32 %v267, %v413
        %v415 = vpop.f32.mrb[0].mxu0
        %416 = vmatprep.mubr.f32.mxu0 0.0
        %417 = vmatmul.mubr.f32.gmra.mrb[0].mxu0 %v291
        %v418 = vpop.f32.mrb[0].mxu0
        %v419 = vadd.f32 %v267, %v418
        %v420 = vpop.f32.mrb[0].mxu0
        %421 = vmatprep.mubr.f32.mxu0 0.0
        %422 = vmatmul.mubr.f32.gmra.mrb[0].mxu0 %v294
        %v423 = vpop.f32.mrb[0].mxu0
        %v424 = vadd.f32 %v267, %v423
        %v425 = vpop.f32.mrb[0].mxu0
        %426 = vmatprep.mubr.f32.mxu0 0.0
        %427 = vmatmul.mubr.f32.gmra.mrb[0].mxu0 %v297
        %v428 = vpop.f32.mrb[0].mxu0
        %v429 = vadd.f32 %v267, %v428
        %v430 = vpop.f32.mrb[0].mxu0
        %431 = vmatprep.mubr.f32.mxu0 0.0
        %432 = vmatmul.mubr.f32.gmra.mrb[0].mxu0 %v300
        %v433 = vpop.f32.mrb[0].mxu0
        %v434 = vadd.f32 %v267, %v433
        %v435 = vpop.f32.mrb[0].mxu0
        %436 = vmatprep.mubr.f32.mxu0 0.0
        %437 = vmatmul.mubr.f32.gmra.mrb[0].mxu0 %v303
        %v438 = vpop.f32.mrb[0].mxu0
        %v439 = vadd.f32 %v267, %v438
        %v440 = vpop.f32.mrb[0].mxu0
        %441 = vmatprep.mubr.f32.mxu0 0.0
        %442 = vmatmul.mubr.f32.gmra.mrb[0].mxu0 %v306
        %v443 = vpop.f32.mrb[0].mxu0
        %v444 = vadd.f32 %v267, %v443
        %v445 = vpop.f32.mrb[0].mxu0
        %446 = vmatprep.mubr.f32.mxu0 0.0
        %447 = vmatmul.mubr.f32.gmra.mrb[0].mxu0 %v309
        %v448 = vpop.f32.mrb[0].mxu0
        %v449 = vadd.f32 %v267, %v448
        %v450 = vpop.f32.mrb[0].mxu0
        %451 = vmatprep.mubr.f32.mxu0 0.0
        %452 = vmatmul.mubr.f32.gmra.mrb[0].mxu0 %v312
        %v453 = vpop.f32.mrb[0].mxu0
        %v454 = vadd.f32 %v267, %v453
        %v455 = vpop.f32.mrb[0].mxu0
        %456 = vmatprep.mubr.f32.mxu0 0.0
        %457 = vmatmul.mubr.f32.gmra.mrb[0].mxu0 %v315
        %v458 = vpop.f32.mrb[0].mxu0
        %v459 = vadd.f32 %v267, %v458
        %v460 = vpop.f32.mrb[0].mxu0
        %461 = vdwg.mxu0
        %v462 = vxor.u32 %v384, 2147483648
        %v463 = vxor.u32 %v389, 2147483648
        %v464 = vxor.u32 %v394, 2147483648
        %v465 = vxor.u32 %v399, 2147483648
        %v466 = vxor.u32 %v404, 2147483648
        %v467 = vxor.u32 %v409, 2147483648
        %v468 = vxor.u32 %v414, 2147483648
        %v469 = vxor.u32 %v419, 2147483648
        %v470 = vxor.u32 %v424, 2147483648
        %v471 = vxor.u32 %v429, 2147483648
        %v472 = vxor.u32 %v434, 2147483648
        %v473 = vxor.u32 %v439, 2147483648
        %v474 = vxor.u32 %v444, 2147483648
        %v475 = vxor.u32 %v449, 2147483648
        %v476 = vxor.u32 %v454, 2147483648
        %v477 = vxor.u32 %v459, 2147483648
        %v478 = vmul.f32 %v462, 1.442695
        %v479 = vpow.pop %v478
        %v480 = vmul.f32 %v463, 1.442695
        %v481 = vpow.pop %v480
        %v482 = vmul.f32 %v464, 1.442695
        %v483 = vpow.pop %v482
        %v484 = vmul.f32 %v465, 1.442695
        %v485 = vpow.pop %v484
        %v486 = vmul.f32 %v466, 1.442695
        %v487 = vpow.pop %v486
        %v488 = vmul.f32 %v467, 1.442695
        %v489 = vpow.pop %v488
        %v490 = vmul.f32 %v468, 1.442695
        %v491 = vpow.pop %v490
        %v492 = vmul.f32 %v469, 1.442695
        %v493 = vpow.pop %v492
        %v494 = vmul.f32 %v470, 1.442695
        %v495 = vpow.pop %v494
        %v496 = vmul.f32 %v471, 1.442695
        %v497 = vpow.pop %v496
        %v498 = vmul.f32 %v472, 1.442695
        %v499 = vpow.pop %v498
        %v500 = vmul.f32 %v473, 1.442695
        %v501 = vpow.pop %v500
        %v502 = vmul.f32 %v474, 1.442695
        %v503 = vpow.pop %v502
        %v504 = vmul.f32 %v475, 1.442695
        %v505 = vpow.pop %v504
        %v506 = vmul.f32 %v476, 1.442695
        %v507 = vpow.pop %v506
        %v508 = vmul.f32 %v477, 1.442695
        %v509 = vpow.pop %v508
        %v510 = vadd.f32 %v479, 1.0
        %v511 = vadd.f32 %v481, 1.0
        %v512 = vadd.f32 %v483, 1.0
        %v513 = vadd.f32 %v485, 1.0
        %v514 = vadd.f32 %v487, 1.0
        %v515 = vadd.f32 %v489, 1.0
        %v516 = vadd.f32 %v491, 1.0
        %v517 = vadd.f32 %v493, 1.0
        %v518 = vadd.f32 %v495, 1.0
        %v519 = vadd.f32 %v497, 1.0
        %v520 = vadd.f32 %v499, 1.0
        %v521 = vadd.f32 %v501, 1.0
        %v522 = vadd.f32 %v503, 1.0
        %v523 = vadd.f32 %v505, 1.0
        %v524 = vadd.f32 %v507, 1.0
        %v525 = vadd.f32 %v509, 1.0
        %v526 = vrcp.pop %v510
        %v527 = vmul.f32 1.0, %v526
        %v528 = vrcp.pop %v511
        %v529 = vmul.f32 1.0, %v528
        %v530 = vrcp.pop %v512
        %v531 = vmul.f32 1.0, %v530
        %v532 = vrcp.pop %v513
        %v533 = vmul.f32 1.0, %v532
        %v534 = vrcp.pop %v514
        %v535 = vmul.f32 1.0, %v534
        %v536 = vrcp.pop %v515
        %v537 = vmul.f32 1.0, %v536
        %v538 = vrcp.pop %v516
        %v539 = vmul.f32 1.0, %v538
        %v540 = vrcp.pop %v517
        %v541 = vmul.f32 1.0, %v540
        %v542 = vrcp.pop %v518
        %v543 = vmul.f32 1.0, %v542
        %v544 = vrcp.pop %v519
        %v545 = vmul.f32 1.0, %v544
        %v546 = vrcp.pop %v520
        %v547 = vmul.f32 1.0, %v546
        %v548 = vrcp.pop %v521
        %v549 = vmul.f32 1.0, %v548
        %v550 = vrcp.pop %v522
        %v551 = vmul.f32 1.0, %v550
        %v552 = vrcp.pop %v523
        %v553 = vmul.f32 1.0, %v552
        %v554 = vrcp.pop %v524
        %v555 = vmul.f32 1.0, %v554
        %v556 = vrcp.pop %v525
        %v557 = vmul.f32 1.0, %v556
        %v558 = vmul.f32 %v384, %v527
        %v559 = vmul.f32 %v389, %v529
        %v560 = vmul.f32 %v394, %v531
        %v561 = vmul.f32 %v399, %v533
        %v562 = vmul.f32 %v404, %v535
        %v563 = vmul.f32 %v409, %v537
        %v564 = vmul.f32 %v414, %v539
        %v565 = vmul.f32 %v419, %v541
        %v566 = vmul.f32 %v424, %v543
        %v567 = vmul.f32 %v429, %v545
        %v568 = vmul.f32 %v434, %v547
        %v569 = vmul.f32 %v439, %v549
        %v570 = vmul.f32 %v444, %v551
        %v571 = vmul.f32 %v449, %v553
        %v572 = vmul.f32 %v454, %v555
        %v573 = vmul.f32 %v459, %v557
        %v574 = vlaneseq
        %v575 = vshrl.u32 %v574, 7
        %v576 = vsub.s32 0, %v575
        %v577 = vrot.slane %v258, %v576
        %v578 = vmul.f32 %v558, %v577
        %v579 = vmul.f32 %v559, %v577
        %v580 = vmul.f32 %v560, %v577
        %v581 = vmul.f32 %v561, %v577
        %v582 = vmul.f32 %v562, %v577
        %v583 = vmul.f32 %v563, %v577
        %v584 = vmul.f32 %v564, %v577
        %v585 = vmul.f32 %v565, %v577
        %v586 = vmul.f32 %v566, %v577
        %v587 = vmul.f32 %v567, %v577
        %v588 = vmul.f32 %v568, %v577
        %v589 = vmul.f32 %v569, %v577
        %v590 = vmul.f32 %v570, %v577
        %v591 = vmul.f32 %v571, %v577
        %v592 = vmul.f32 %v572, %v577
        %v593 = vmul.f32 %v573, %v577
        %vm594 = vcmask 130048
        %v595 = vsel %vm594, %v578, 0.0
        %596 = vadd.xlane.f32.xlu0 %v595
        %v597 = vpop.xlane.xlu0 %596
        %v598 = vsel %vm594, %v579, 0.0
        %599 = vadd.xlane.f32.xlu0 %v598
        %v600 = vpop.xlane.xlu0 %599
        %v601 = vsel %vm594, %v580, 0.0
        %602 = vadd.xlane.f32.xlu0 %v601
        %v603 = vpop.xlane.xlu0 %602
        %v604 = vsel %vm594, %v581, 0.0
        %605 = vadd.xlane.f32.xlu0 %v604
        %v606 = vpop.xlane.xlu0 %605
        %v607 = vsel %vm594, %v582, 0.0
        %608 = vadd.xlane.f32.xlu0 %v607
        %v609 = vpop.xlane.xlu0 %608
        %v610 = vsel %vm594, %v583, 0.0
        %611 = vadd.xlane.f32.xlu0 %v610
        %v612 = vpop.xlane.xlu0 %611
        %v613 = vsel %vm594, %v584, 0.0
        %614 = vadd.xlane.f32.xlu0 %v613
        %v615 = vpop.xlane.xlu0 %614
        %v616 = vsel %vm594, %v585, 0.0
        %617 = vadd.xlane.f32.xlu0 %v616
        %v618 = vpop.xlane.xlu0 %617
        %v619 = vsel %vm594, %v586, 0.0
        %620 = vadd.xlane.f32.xlu0 %v619
        %v621 = vpop.xlane.xlu0 %620
        %v622 = vsel %vm594, %v587, 0.0
        %623 = vadd.xlane.f32.xlu0 %v622
        %v624 = vpop.xlane.xlu0 %623
        %v625 = vsel %vm594, %v588, 0.0
        %626 = vadd.xlane.f32.xlu0 %v625
        %v627 = vpop.xlane.xlu0 %626
        %v628 = vsel %vm594, %v589, 0.0
        %629 = vadd.xlane.f32.xlu0 %v628
        %v630 = vpop.xlane.xlu0 %629
        %v631 = vsel %vm594, %v590, 0.0
        %632 = vadd.xlane.f32.xlu0 %v631
        %v633 = vpop.xlane.xlu0 %632
        %v634 = vsel %vm594, %v591, 0.0
        %635 = vadd.xlane.f32.xlu0 %v634
        %v636 = vpop.xlane.xlu0 %635
        %v637 = vsel %vm594, %v592, 0.0
        %638 = vadd.xlane.f32.xlu0 %v637
        %v639 = vpop.xlane.xlu0 %638
        %v640 = vsel %vm594, %v593, 0.0
        %641 = vadd.xlane.f32.xlu0 %v640
        %v642 = vpop.xlane.xlu0 %641
        %v643 = vlaneseq
        %v644 = vshrl.u32 %v643, 7
        %v645 = vsub.s32 0, %v644
        %v646 = vrot.slane %v259, %v645
        %v647 = vadd.f32 %v597, %v646
        %v648 = vadd.f32 %v600, %v646
        %v649 = vadd.f32 %v603, %v646
        %v650 = vadd.f32 %v606, %v646
        %v651 = vadd.f32 %v609, %v646
        %v652 = vadd.f32 %v612, %v646
        %v653 = vadd.f32 %v615, %v646
        %v654 = vadd.f32 %v618, %v646
        %v655 = vadd.f32 %v621, %v646
        %v656 = vadd.f32 %v624, %v646
        %v657 = vadd.f32 %v627, %v646
        %v658 = vadd.f32 %v630, %v646
        %v659 = vadd.f32 %v633, %v646
        %v660 = vadd.f32 %v636, %v646
        %v661 = vadd.f32 %v639, %v646
        %v662 = vadd.f32 %v642, %v646
        %vm663 = vcmp.ge.f32.partialorder %v240, 0.0
        %vm664 = vcmp.ge.f32.partialorder %v241, 0.0
        %vm665 = vcmp.ge.f32.partialorder %v242, 0.0
        %vm666 = vcmp.ge.f32.partialorder %v243, 0.0
        %vm667 = vcmp.ge.f32.partialorder %v244, 0.0
        %vm668 = vcmp.ge.f32.partialorder %v245, 0.0
        %vm669 = vcmp.ge.f32.partialorder %v246, 0.0
        %vm670 = vcmp.ge.f32.partialorder %v247, 0.0
        %vm671 = vcmp.ge.f32.partialorder %v248, 0.0
        %vm672 = vcmp.ge.f32.partialorder %v249, 0.0
        %vm673 = vcmp.ge.f32.partialorder %v250, 0.0
        %vm674 = vcmp.ge.f32.partialorder %v251, 0.0
        %vm675 = vcmp.ge.f32.partialorder %v252, 0.0
        %vm676 = vcmp.ge.f32.partialorder %v253, 0.0
        %vm677 = vcmp.ge.f32.partialorder %v254, 0.0
        %vm678 = vcmp.ge.f32.partialorder %v255, 0.0
        %695 = vrot.lane.b32.xlu0 %v647, 32
        %v696 = vpop.permute.xlu0 %695
        %697 = vrot.lane.b32.xlu0 %v648, 32
        %v698 = vpop.permute.xlu0 %697
        %699 = vrot.lane.b32.xlu0 %v649, 32
        %v700 = vpop.permute.xlu0 %699
        %701 = vrot.lane.b32.xlu0 %v650, 32
        %v702 = vpop.permute.xlu0 %701
        %703 = vrot.lane.b32.xlu0 %v651, 32
        %v704 = vpop.permute.xlu0 %703
        %705 = vrot.lane.b32.xlu0 %v652, 32
        %v706 = vpop.permute.xlu0 %705
        %707 = vrot.lane.b32.xlu0 %v653, 32
        %v708 = vpop.permute.xlu0 %707
        %709 = vrot.lane.b32.xlu0 %v654, 32
        %v710 = vpop.permute.xlu0 %709
        %711 = vrot.lane.b32.xlu0 %v655, 32
        %v712 = vpop.permute.xlu0 %711
        %713 = vrot.lane.b32.xlu0 %v656, 32
        %v714 = vpop.permute.xlu0 %713
        %715 = vrot.lane.b32.xlu0 %v657, 32
        %v716 = vpop.permute.xlu0 %715
        %717 = vrot.lane.b32.xlu0 %v658, 32
        %v718 = vpop.permute.xlu0 %717
        %719 = vrot.lane.b32.xlu0 %v659, 32
        %v720 = vpop.permute.xlu0 %719
        %721 = vrot.lane.b32.xlu0 %v660, 32
        %v722 = vpop.permute.xlu0 %721
        %723 = vrot.lane.b32.xlu0 %v661, 32
        %v724 = vpop.permute.xlu0 %723
        %725 = vrot.lane.b32.xlu0 %v662, 32
        %v726 = vpop.permute.xlu0 %725
        %v743 = vsel %vm663, %v696, -1e+30
        %v744 = vsel %vm664, %v698, -1e+30
        %v745 = vsel %vm665, %v700, -1e+30
        %v746 = vsel %vm666, %v702, -1e+30
        %v747 = vsel %vm667, %v704, -1e+30
        %v748 = vsel %vm668, %v706, -1e+30
        %v749 = vsel %vm669, %v708, -1e+30
        %v750 = vsel %vm670, %v710, -1e+30
        %v751 = vsel %vm671, %v712, -1e+30
        %v752 = vsel %vm672, %v714, -1e+30
        %v753 = vsel %vm673, %v716, -1e+30
        %v754 = vsel %vm674, %v718, -1e+30
        %v755 = vsel %vm675, %v720, -1e+30
        %v756 = vsel %vm676, %v722, -1e+30
        %v757 = vsel %vm677, %v724, -1e+30
        %v758 = vsel %vm678, %v726, -1e+30
        %v759 = vld [vmem:[#allocation6] sm:$0x1]
        %vm760 = vcmask 269568
        %v761 = vsel %vm760, %v743, -inf
        %v762 = vsel %vm760, %v744, -inf
        %v763 = vsel %vm760, %v745, -inf
        %v764 = vsel %vm760, %v746, -inf
        %v765 = vsel %vm760, %v747, -inf
        %v766 = vmax.f32 %v761, %v765
        %v767 = vsel %vm760, %v748, -inf
        %v768 = vmax.f32 %v762, %v767
        %v769 = vsel %vm760, %v749, -inf
        %v770 = vmax.f32 %v763, %v769
        %v771 = vsel %vm760, %v750, -inf
        %v772 = vmax.f32 %v764, %v771
        %v773 = vsel %vm760, %v751, -inf
        %v774 = vmax.f32 %v766, %v773
        %v775 = vsel %vm760, %v752, -inf
        %v776 = vmax.f32 %v768, %v775
        %v777 = vsel %vm760, %v753, -inf
        %v778 = vmax.f32 %v770, %v777
        %v779 = vsel %vm760, %v754, -inf
        %v780 = vmax.f32 %v772, %v779
        %v781 = vsel %vm760, %v755, -inf
        %v782 = vmax.f32 %v774, %v781
        %v783 = vsel %vm760, %v756, -inf
        %v784 = vmax.f32 %v776, %v783
        %v785 = vsel %vm760, %v757, -inf
        %v786 = vmax.f32 %v778, %v785
        %v787 = vsel %vm760, %v758, -inf
        %v788 = vmax.f32 %v780, %v787
        %v789 = vmax.f32 %v782, %v784
        %v790 = vmax.f32 %v786, %v788
        %v791 = vmax.f32 %v789, %v790
        %v792 = vrot.slane %v791, 4
        %v793 = vmax.f32 %v791, %v792
        %v794 = vrot.slane %v793, 2
        %v795 = vmax.f32 %v793, %v794
        %v796 = vrot.slane %v795, 1
        %v797 = vmax.f32 %v795, %v796
        %v800 = vunpack.c.l.s4 1966171168
        %v801 = vunpack.c.0.s8 %v800
        %v802 = vlaneseq
        %v803 = vshrl.u32 %v802, 7
        %v804 = vsub.s32 %v801, %v803
        %v805 = vrot.slane %v797, %v804
        %v807 = vunpack.c.l.s4 1966171168
        %v808 = vunpack.c.0.s8 %v807
        %v809 = vlaneseq
        %v810 = vshrl.u32 %v809, 7
        %v811 = vsub.s32 %v808, %v810
        %v812 = vrot.slane %v805, %v811
        %813 = vrot.lane.b32.xlu0 %v812, 96
        %v814 = vpop.permute.xlu0 %813
        %v816 = vmax.f32 %v759, %v814
        %v817 = vsub.f32 %v759, %v816
        %v818 = vmul.f32 %v817, 1.442695
        %v819 = vpow.pop %v818
        %v821 = vlaneseq
        %v822 = vshrl.u32 %v821, 7
        %v823 = vsub.s32 0, %v822
        %v824 = vrot.slane %v816, %v823
        %825 = vrot.lane.b32.xlu0 %v824, 32
        %v826 = vpop.permute.xlu0 %825
        %v828 = vsub.f32 %v743, %v826
        %v829 = vsub.f32 %v744, %v826
        %v830 = vsub.f32 %v745, %v826
        %v831 = vsub.f32 %v746, %v826
        %v832 = vsub.f32 %v747, %v826
        %v833 = vsub.f32 %v748, %v826
        %v834 = vsub.f32 %v749, %v826
        %v835 = vsub.f32 %v750, %v826
        %v836 = vsub.f32 %v751, %v826
        %v837 = vsub.f32 %v752, %v826
        %v838 = vsub.f32 %v753, %v826
        %v839 = vsub.f32 %v754, %v826
        %v840 = vsub.f32 %v755, %v826
        %v841 = vsub.f32 %v756, %v826
        %v842 = vsub.f32 %v757, %v826
        %v843 = vsub.f32 %v758, %v826
        %v844 = vmul.f32 %v828, 1.442695
        %v845 = vpow.pop %v844
        %v846 = vmul.f32 %v829, 1.442695
        %v847 = vpow.pop %v846
        %v848 = vmul.f32 %v830, 1.442695
        %v849 = vpow.pop %v848
        %v850 = vmul.f32 %v831, 1.442695
        %v851 = vpow.pop %v850
        %v852 = vmul.f32 %v832, 1.442695
        %v853 = vpow.pop %v852
        %v854 = vmul.f32 %v833, 1.442695
        %v855 = vpow.pop %v854
        %v856 = vmul.f32 %v834, 1.442695
        %v857 = vpow.pop %v856
        %v858 = vmul.f32 %v835, 1.442695
        %v859 = vpow.pop %v858
        %v860 = vmul.f32 %v836, 1.442695
        %v861 = vpow.pop %v860
        %v862 = vmul.f32 %v837, 1.442695
        %v863 = vpow.pop %v862
        %v864 = vmul.f32 %v838, 1.442695
        %v865 = vpow.pop %v864
        %v866 = vmul.f32 %v839, 1.442695
        %v867 = vpow.pop %v866
        %v868 = vmul.f32 %v840, 1.442695
        %v869 = vpow.pop %v868
        %v870 = vmul.f32 %v841, 1.442695
        %v871 = vpow.pop %v870
        %v872 = vmul.f32 %v842, 1.442695
        %v873 = vpow.pop %v872
        %v874 = vmul.f32 %v843, 1.442695
        %v875 = vpow.pop %v874
        %v876 = vsel %vm663, %v845, 0.0
        %v877 = vsel %vm664, %v847, 0.0
        %v878 = vsel %vm665, %v849, 0.0
        %v879 = vsel %vm666, %v851, 0.0
        %v880 = vsel %vm667, %v853, 0.0
        %v881 = vsel %vm668, %v855, 0.0
        %v882 = vsel %vm669, %v857, 0.0
        %v883 = vsel %vm670, %v859, 0.0
        %v884 = vsel %vm671, %v861, 0.0
        %v885 = vsel %vm672, %v863, 0.0
        %v886 = vsel %vm673, %v865, 0.0
        %v887 = vsel %vm674, %v867, 0.0
        %v888 = vsel %vm675, %v869, 0.0
        %v889 = vsel %vm676, %v871, 0.0
        %v890 = vsel %vm677, %v873, 0.0
        %v891 = vsel %vm678, %v875, 0.0
        %v892 = vld [vmem:[#allocation7] sm:$0x1]
        %v893 = vmul.f32 %v819, %v892
        %v894 = vsel %vm760, %v876, 0.0
        %v895 = vsel %vm760, %v877, 0.0
        %v896 = vadd.f32 %v894, %v895
        %v897 = vsel %vm760, %v878, 0.0
        %v898 = vadd.f32 %v896, %v897
        %v899 = vsel %vm760, %v879, 0.0
        %v900 = vadd.f32 %v898, %v899
        %v901 = vsel %vm760, %v880, 0.0
        %v902 = vadd.f32 %v900, %v901
        %v903 = vsel %vm760, %v881, 0.0
        %v904 = vadd.f32 %v902, %v903
        %v905 = vsel %vm760, %v882, 0.0
        %v906 = vadd.f32 %v904, %v905
        %v907 = vsel %vm760, %v883, 0.0
        %v908 = vadd.f32 %v906, %v907
        %v909 = vsel %vm760, %v884, 0.0
        %v910 = vadd.f32 %v908, %v909
        %v911 = vsel %vm760, %v885, 0.0
        %v912 = vadd.f32 %v910, %v911
        %v913 = vsel %vm760, %v886, 0.0
        %v914 = vadd.f32 %v912, %v913
        %v915 = vsel %vm760, %v887, 0.0
        %v916 = vadd.f32 %v914, %v915
        %v917 = vsel %vm760, %v888, 0.0
        %v918 = vadd.f32 %v916, %v917
        %v919 = vsel %vm760, %v889, 0.0
        %v920 = vadd.f32 %v918, %v919
        %v921 = vsel %vm760, %v890, 0.0
        %v922 = vadd.f32 %v920, %v921
        %v923 = vsel %vm760, %v891, 0.0
        %v924 = vadd.f32 %v922, %v923
        %v925 = vrot.slane %v924, 4
        %v926 = vadd.f32 %v924, %v925
        %v927 = vrot.slane %v926, 2
        %v928 = vadd.f32 %v926, %v927
        %v929 = vrot.slane %v928, 1
        %v930 = vadd.f32 %v928, %v929
        %v933 = vunpack.c.l.s4 1966171168
        %v934 = vunpack.c.0.s8 %v933
        %v935 = vlaneseq
        %v936 = vshrl.u32 %v935, 7
        %v937 = vsub.s32 %v934, %v936
        %v938 = vrot.slane %v930, %v937
        %v940 = vunpack.c.l.s4 1966171168
        %v941 = vunpack.c.0.s8 %v940
        %v942 = vlaneseq
        %v943 = vshrl.u32 %v942, 7
        %v944 = vsub.s32 %v941, %v943
        %v945 = vrot.slane %v938, %v944
        %946 = vrot.lane.b32.xlu0 %v945, 96
        %v947 = vpop.permute.xlu0 %946
        %v949 = vadd.f32 %v893, %v947
        %vm950 = vcmask 0
        %951 = vst.msk [vmem:[#allocation7] sm:$0x1] %vm950, %v949
        %952 = vst.msk [vmem:[#allocation6] sm:$0x1] %vm950, %v816
        %v953 = vlaneseq
        %v954 = vshrl.u32 %v953, 7
        %v955 = vlaneseq
        %v956 = vshrl.u32 %v955, 7
        %v957 = vsub.s32 0, %v956
        %v958 = vrot.slane %v256, %v957
        %vm959 = vcmp.eq.s32.totalorder %v954, %v958
        %vm960 = vcmp.ge.s32.totalorder %v256, 0
        %v961 = vsel %vm960, 1, 0
        %v962 = vlaneseq
        %v963 = vshrl.u32 %v962, 7
        %v964 = vsub.s32 0, %v963
        %v965 = vrot.slane %v961, %v964
        %vm966 = vcmp.eq.s32.totalorder %v965, 1
        %vm967 = vmand %vm959, %vm966
        %v968 = vsel %vm967, 1, 0
        %v969 = vcvt.s32.f32 %v968
        %971 = vset.pattern.permute.xlu0 32
        %972 = vperm.xlu0 %971, %v876
        %v973 = vpop.permute.xlu0 %972
        %976 = vset.pattern.permute.xlu0 32
        %977 = vperm.xlu0 %976, %v877
        %v978 = vpop.permute.xlu0 %977
        %981 = vset.pattern.permute.xlu0 32
        %982 = vperm.xlu0 %981, %v878
        %v983 = vpop.permute.xlu0 %982
        %986 = vset.pattern.permute.xlu0 32
        %987 = vperm.xlu0 %986, %v879
        %v988 = vpop.permute.xlu0 %987
        %991 = vset.pattern.permute.xlu0 32
        %992 = vperm.xlu0 %991, %v880
        %v993 = vpop.permute.xlu0 %992
        %996 = vset.pattern.permute.xlu0 32
        %997 = vperm.xlu0 %996, %v881
        %v998 = vpop.permute.xlu0 %997
        %1001 = vset.pattern.permute.xlu0 32
        %1002 = vperm.xlu0 %1001, %v882
        %v1003 = vpop.permute.xlu0 %1002
        %1006 = vset.pattern.permute.xlu0 32
        %1007 = vperm.xlu0 %1006, %v883
        %v1008 = vpop.permute.xlu0 %1007
        %1011 = vset.pattern.permute.xlu0 32
        %1012 = vperm.xlu0 %1011, %v884
        %v1013 = vpop.permute.xlu0 %1012
        %1016 = vset.pattern.permute.xlu0 32
        %1017 = vperm.xlu0 %1016, %v885
        %v1018 = vpop.permute.xlu0 %1017
        %1021 = vset.pattern.permute.xlu0 32
        %1022 = vperm.xlu0 %1021, %v886
        %v1023 = vpop.permute.xlu0 %1022
        %1026 = vset.pattern.permute.xlu0 32
        %1027 = vperm.xlu0 %1026, %v887
        %v1028 = vpop.permute.xlu0 %1027
        %1031 = vset.pattern.permute.xlu0 32
        %1032 = vperm.xlu0 %1031, %v888
        %v1033 = vpop.permute.xlu0 %1032
        %1036 = vset.pattern.permute.xlu0 32
        %1037 = vperm.xlu0 %1036, %v889
        %v1038 = vpop.permute.xlu0 %1037
        %1041 = vset.pattern.permute.xlu0 32
        %1042 = vperm.xlu0 %1041, %v890
        %v1043 = vpop.permute.xlu0 %1042
        %1046 = vset.pattern.permute.xlu0 32
        %1047 = vperm.xlu0 %1046, %v891
        %v1048 = vpop.permute.xlu0 %1047
        %v1050 = vmul.f32 %v973, %v240
        %v1051 = vmul.f32 %v978, %v241
        %v1052 = vmul.f32 %v983, %v242
        %v1053 = vmul.f32 %v988, %v243
        %v1054 = vmul.f32 %v993, %v244
        %v1055 = vmul.f32 %v998, %v245
        %v1056 = vmul.f32 %v1003, %v246
        %v1057 = vmul.f32 %v1008, %v247
        %v1058 = vmul.f32 %v1013, %v248
        %v1059 = vmul.f32 %v1018, %v249
        %v1060 = vmul.f32 %v1023, %v250
        %v1061 = vmul.f32 %v1028, %v251
        %v1062 = vmul.f32 %v1033, %v252
        %v1063 = vmul.f32 %v1038, %v253
        %v1064 = vmul.f32 %v1043, %v254
        %v1065 = vmul.f32 %v1048, %v255
        %1082 = vrot.lane.b32.xlu0 %v1050, 32
        %v1083 = vpop.permute.xlu0 %1082
        %1084 = vrot.lane.b32.xlu0 %v1051, 32
        %v1085 = vpop.permute.xlu0 %1084
        %1086 = vrot.lane.b32.xlu0 %v1052, 32
        %v1087 = vpop.permute.xlu0 %1086
        %1088 = vrot.lane.b32.xlu0 %v1053, 32
        %v1089 = vpop.permute.xlu0 %1088
        %1090 = vrot.lane.b32.xlu0 %v1054, 32
        %v1091 = vpop.permute.xlu0 %1090
        %1092 = vrot.lane.b32.xlu0 %v1055, 32
        %v1093 = vpop.permute.xlu0 %1092
        %1094 = vrot.lane.b32.xlu0 %v1056, 32
        %v1095 = vpop.permute.xlu0 %1094
        %1096 = vrot.lane.b32.xlu0 %v1057, 32
        %v1097 = vpop.permute.xlu0 %1096
        %1098 = vrot.lane.b32.xlu0 %v1058, 32
        %v1099 = vpop.permute.xlu0 %1098
        %1100 = vrot.lane.b32.xlu0 %v1059, 32
        %v1101 = vpop.permute.xlu0 %1100
        %1102 = vrot.lane.b32.xlu0 %v1060, 32
        %v1103 = vpop.permute.xlu0 %1102
        %1104 = vrot.lane.b32.xlu0 %v1061, 32
        %v1105 = vpop.permute.xlu0 %1104
        %1106 = vrot.lane.b32.xlu0 %v1062, 32
        %v1107 = vpop.permute.xlu0 %1106
        %1108 = vrot.lane.b32.xlu0 %v1063, 32
        %v1109 = vpop.permute.xlu0 %1108
        %1110 = vrot.lane.b32.xlu0 %v1064, 32
        %v1111 = vpop.permute.xlu0 %1110
        %1112 = vrot.lane.b32.xlu0 %v1065, 32
        %v1113 = vpop.permute.xlu0 %1112
        %v1130 = vsel %vm268, %v240, %v1083
        %v1131 = vsel %vm268, %v241, %v1085
        %v1132 = vsel %vm268, %v242, %v1087
        %v1133 = vsel %vm268, %v243, %v1089
        %v1134 = vsel %vm268, %v244, %v1091
        %v1135 = vsel %vm268, %v245, %v1093
        %v1136 = vsel %vm268, %v246, %v1095
        %v1137 = vsel %vm268, %v247, %v1097
        %v1138 = vsel %vm268, %v248, %v1099
        %v1139 = vsel %vm268, %v249, %v1101
        %v1140 = vsel %vm268, %v250, %v1103
        %v1141 = vsel %vm268, %v251, %v1105
        %v1142 = vsel %vm268, %v252, %v1107
        %v1143 = vsel %vm268, %v253, %v1109
        %v1144 = vsel %vm268, %v254, %v1111
        %v1145 = vsel %vm268, %v255, %v1113
        %vm1146 = vcmask 523264
        %v1147 = vsel %vm1146, %v1130, 1.0
        %v1148 = vsel %vm1146, %v1131, 1.0
        %v1149 = vsel %vm1146, %v1132, 1.0
        %v1150 = vsel %vm1146, %v1133, 1.0
        %v1151 = vsel %vm1146, %v1134, 1.0
        %v1152 = vsel %vm1146, %v1135, 1.0
        %v1153 = vsel %vm1146, %v1136, 1.0
        %v1154 = vsel %vm1146, %v1137, 1.0
        %v1155 = vsel %vm1146, %v1138, 1.0
        %v1156 = vsel %vm1146, %v1139, 1.0
        %v1157 = vsel %vm1146, %v1140, 1.0
        %v1158 = vsel %vm1146, %v1141, 1.0
        %v1159 = vsel %vm1146, %v1142, 1.0
        %v1160 = vsel %vm1146, %v1143, 1.0
        %v1161 = vsel %vm1146, %v1144, 1.0
        %v1162 = vsel %vm1146, %v1145, 1.0
        %1163 = vmatprep.subr.mxu0 0.0
        %1164 = vmatpush1.msra.mxu0 %v1147
        %1165 = vmatprep.subr.mxu0 0.0
        %1166 = vmatpush1.msra.mxu0 %v1148
        %1167 = vmatprep.subr.mxu0 0.0
        %1168 = vmatpush1.msra.mxu0 %v1149
        %1169 = vmatprep.subr.mxu0 0.0
        %1170 = vmatpush1.msra.mxu0 %v1150
        %1171 = vmatprep.subr.mxu0 0.0
        %1172 = vmatpush1.msra.mxu0 %v1151
        %1173 = vmatprep.subr.mxu0 0.0
        %1174 = vmatpush1.msra.mxu0 %v1152
        %1175 = vmatprep.subr.mxu0 0.0
        %1176 = vmatpush1.msra.mxu0 %v1153
        %1177 = vmatprep.subr.mxu0 0.0
        %1178 = vmatpush1.msra.mxu0 %v1154
        %1179 = vmatprep.subr.mxu0 0.0
        %1180 = vmatpush1.msra.mxu0 %v1155
        %1181 = vmatprep.subr.mxu0 0.0
        %1182 = vmatpush1.msra.mxu0 %v1156
        %1183 = vmatprep.subr.mxu0 0.0
        %1184 = vmatpush1.msra.mxu0 %v1157
        %1185 = vmatprep.subr.mxu0 0.0
        %1186 = vmatpush1.msra.mxu0 %v1158
        %1187 = vmatprep.subr.mxu0 0.0
        %1188 = vmatpush1.msra.mxu0 %v1159
        %1189 = vmatprep.subr.mxu0 0.0
        %1190 = vmatpush1.msra.mxu0 %v1160
        %1191 = vmatprep.subr.mxu0 0.0
        %1192 = vmatpush1.msra.mxu0 %v1161
        %1193 = vmatprep.subr.mxu0 0.0
        %1194 = vmatpush1.msra.mxu0 %v1162
        %1195 = vmatprep.subr.mxu0 0.0
        %1196 = vmatpush1.msra.mxu0 0.0
        %1197 = vmatprep.subr.mxu0 0.0
        %1198 = vmatpush1.msra.mxu0 0.0
        %1199 = vmatprep.subr.mxu0 0.0
        %1200 = vmatpush1.msra.mxu0 0.0
        %1201 = vmatprep.subr.mxu0 0.0
        %1202 = vmatpush1.msra.mxu0 0.0
        %1203 = vmatprep.subr.mxu0 0.0
        %1204 = vmatpush1.msra.mxu0 0.0
        %1205 = vmatprep.subr.mxu0 0.0
        %1206 = vmatpush1.msra.mxu0 0.0
        %1207 = vmatprep.subr.mxu0 0.0
        %1208 = vmatpush1.msra.mxu0 0.0
        %1209 = vmatprep.subr.mxu0 0.0
        %1210 = vmatpush1.msra.mxu0 0.0
        %1211 = vmatprep.subr.mxu0 0.0
        %1212 = vmatpush1.msra.mxu0 0.0
        %1213 = vmatprep.subr.mxu0 0.0
        %1214 = vmatpush1.msra.mxu0 0.0
        %1215 = vmatprep.subr.mxu0 0.0
        %1216 = vmatpush1.msra.mxu0 0.0
        %1217 = vmatprep.subr.mxu0 0.0
        %1218 = vmatpush1.msra.mxu0 0.0
        %1219 = vmatprep.subr.mxu0 0.0
        %1220 = vmatpush1.msra.mxu0 0.0
        %1221 = vmatprep.subr.mxu0 0.0
        %1222 = vmatpush1.msra.mxu0 0.0
        %1223 = vmatprep.subr.mxu0 0.0
        %1224 = vmatpush1.msra.mxu0 0.0
        %1225 = vmatprep.subr.mxu0 0.0
        %1226 = vmatpush1.msra.mxu0 0.0
        %1227 = vmatprep.mubr.f32.mxu0 0.0
        %1228 = vmatmul.mubr.f32.gmra.mrb[0].mxu0 %v969
        %v1229 = vpop.f32.mrb[0].mxu0
        %v1230 = vadd.f32 0.0, %v1229
        %v1231 = vpop.f32.mrb[0].mxu0
        %1232 = vdwg.mxu0
        %v1233 = vld [vmem:[#allocation2] sm:$0xff]
        %v1234 = vadd.f32 %v1233, %v1230
        %1235 = vst.msk [vmem:[#allocation2] sm:$0xff] %vm268, %v1234
        %v1236 = vld [vmem:[#allocation3] sm:$0xff]
        %v1238 = vlaneseq
        %v1239 = vshrl.u32 %v1238, 7
        %v1240 = vsub.s32 0, %v1239
        %v1241 = vrot.slane %v819, %v1240
        %1242 = vset.pattern.permute.xlu0 0
        %1243 = vperm.xlu0 %1242, %v1241
        %v1244 = vpop.permute.xlu0 %1243
        %v1246 = vmul.f32 %v1244, %v1236
        %1248 = vrot.lane.b32.xlu0 %v1230, 96
        %v1249 = vpop.permute.xlu0 %1248
        %v1251 = vadd.f32 %v1246, %v1249
        %1252 = vst.msk [vmem:[#allocation3] sm:$0xff] %vm268, %v1251
        %v1253 = vld [vmem:[#allocation5] sm:$0xff]
        %1254 = vrot.lane.b32.xlu0 %v1230, 64
        %v1255 = vpop.permute.xlu0 %1254
        %v1257 = vadd.f32 %v1253, %v1255
        %vm1258 = vcmask 7168
        %1259 = vst.msk [vmem:[#allocation5] sm:$0xff] %vm1258, %v1257
        %vm1260 = vcmp.eq.f32.partialorder %v240, 0.0
        %vm1261 = vcmp.eq.f32.partialorder %v241, 0.0
        %vm1262 = vcmp.eq.f32.partialorder %v242, 0.0
        %vm1263 = vcmp.eq.f32.partialorder %v243, 0.0
        %vm1264 = vcmp.eq.f32.partialorder %v244, 0.0
        %vm1265 = vcmp.eq.f32.partialorder %v245, 0.0
        %vm1266 = vcmp.eq.f32.partialorder %v246, 0.0
        %vm1267 = vcmp.eq.f32.partialorder %v247, 0.0
        %vm1268 = vcmp.eq.f32.partialorder %v248, 0.0
        %vm1269 = vcmp.eq.f32.partialorder %v249, 0.0
        %vm1270 = vcmp.eq.f32.partialorder %v250, 0.0
        %vm1271 = vcmp.eq.f32.partialorder %v251, 0.0
        %vm1272 = vcmp.eq.f32.partialorder %v252, 0.0
        %vm1273 = vcmp.eq.f32.partialorder %v253, 0.0
        %vm1274 = vcmp.eq.f32.partialorder %v254, 0.0
        %vm1275 = vcmp.eq.f32.partialorder %v255, 0.0
        %v1276 = vsel %vm1260, 1, 0
        %v1277 = vsel %vm1261, 1, 0
        %v1278 = vsel %vm1262, 1, 0
        %v1279 = vsel %vm1263, 1, 0
        %v1280 = vsel %vm1264, 1, 0
        %v1281 = vsel %vm1265, 1, 0
        %v1282 = vsel %vm1266, 1, 0
        %v1283 = vsel %vm1267, 1, 0
        %v1284 = vsel %vm1268, 1, 0
        %v1285 = vsel %vm1269, 1, 0
        %v1286 = vsel %vm1270, 1, 0
        %v1287 = vsel %vm1271, 1, 0
        %v1288 = vsel %vm1272, 1, 0
        %v1289 = vsel %vm1273, 1, 0
        %v1290 = vsel %vm1274, 1, 0
        %v1291 = vsel %vm1275, 1, 0
        %1292 = vset.pattern.permute.xlu0 32
        %1293 = vperm.xlu0 %1292, %v1276
        %v1294 = vpop.permute.xlu0 %1293
        %1295 = vset.pattern.permute.xlu0 32
        %1296 = vperm.xlu0 %1295, %v1277
        %v1297 = vpop.permute.xlu0 %1296
        %1298 = vset.pattern.permute.xlu0 32
        %1299 = vperm.xlu0 %1298, %v1278
        %v1300 = vpop.permute.xlu0 %1299
        %1301 = vset.pattern.permute.xlu0 32
        %1302 = vperm.xlu0 %1301, %v1279
        %v1303 = vpop.permute.xlu0 %1302
        %1304 = vset.pattern.permute.xlu0 32
        %1305 = vperm.xlu0 %1304, %v1280
        %v1306 = vpop.permute.xlu0 %1305
        %1307 = vset.pattern.permute.xlu0 32
        %1308 = vperm.xlu0 %1307, %v1281
        %v1309 = vpop.permute.xlu0 %1308
        %1310 = vset.pattern.permute.xlu0 32
        %1311 = vperm.xlu0 %1310, %v1282
        %v1312 = vpop.permute.xlu0 %1311
        %1313 = vset.pattern.permute.xlu0 32
        %1314 = vperm.xlu0 %1313, %v1283
        %v1315 = vpop.permute.xlu0 %1314
        %1316 = vset.pattern.permute.xlu0 32
        %1317 = vperm.xlu0 %1316, %v1284
        %v1318 = vpop.permute.xlu0 %1317
        %1319 = vset.pattern.permute.xlu0 32
        %1320 = vperm.xlu0 %1319, %v1285
        %v1321 = vpop.permute.xlu0 %1320
        %1322 = vset.pattern.permute.xlu0 32
        %1323 = vperm.xlu0 %1322, %v1286
        %v1324 = vpop.permute.xlu0 %1323
        %1325 = vset.pattern.permute.xlu0 32
        %1326 = vperm.xlu0 %1325, %v1287
        %v1327 = vpop.permute.xlu0 %1326
        %1328 = vset.pattern.permute.xlu0 32
        %1329 = vperm.xlu0 %1328, %v1288
        %v1330 = vpop.permute.xlu0 %1329
        %1331 = vset.pattern.permute.xlu0 32
        %1332 = vperm.xlu0 %1331, %v1289
        %v1333 = vpop.permute.xlu0 %1332
        %1334 = vset.pattern.permute.xlu0 32
        %1335 = vperm.xlu0 %1334, %v1290
        %v1336 = vpop.permute.xlu0 %1335
        %1337 = vset.pattern.permute.xlu0 32
        %1338 = vperm.xlu0 %1337, %v1291
        %v1339 = vpop.permute.xlu0 %1338
        %vm1340 = vcmp.eq.s32.totalorder %v1294, 1
        %vm1341 = vcmp.eq.s32.totalorder %v1297, 1
        %vm1342 = vcmp.eq.s32.totalorder %v1300, 1
        %vm1343 = vcmp.eq.s32.totalorder %v1303, 1
        %vm1344 = vcmp.eq.s32.totalorder %v1306, 1
        %vm1345 = vcmp.eq.s32.totalorder %v1309, 1
        %vm1346 = vcmp.eq.s32.totalorder %v1312, 1
        %vm1347 = vcmp.eq.s32.totalorder %v1315, 1
        %vm1348 = vcmp.eq.s32.totalorder %v1318, 1
        %vm1349 = vcmp.eq.s32.totalorder %v1321, 1
        %vm1350 = vcmp.eq.s32.totalorder %v1324, 1
        %vm1351 = vcmp.eq.s32.totalorder %v1327, 1
        %vm1352 = vcmp.eq.s32.totalorder %v1330, 1
        %vm1353 = vcmp.eq.s32.totalorder %v1333, 1
        %vm1354 = vcmp.eq.s32.totalorder %v1336, 1
        %vm1355 = vcmp.eq.s32.totalorder %v1339, 1
        %v1356 = vsel %vm1340, %v240, -1e+30
        %v1357 = vsel %vm1341, %v241, -1e+30
        %v1358 = vsel %vm1342, %v242, -1e+30
        %v1359 = vsel %vm1343, %v243, -1e+30
        %v1360 = vsel %vm1344, %v244, -1e+30
        %v1361 = vsel %vm1345, %v245, -1e+30
        %v1362 = vsel %vm1346, %v246, -1e+30
        %v1363 = vsel %vm1347, %v247, -1e+30
        %v1364 = vsel %vm1348, %v248, -1e+30
        %v1365 = vsel %vm1349, %v249, -1e+30
        %v1366 = vsel %vm1350, %v250, -1e+30
        %v1367 = vsel %vm1351, %v251, -1e+30
        %v1368 = vsel %vm1352, %v252, -1e+30
        %v1369 = vsel %vm1353, %v253, -1e+30
        %v1370 = vsel %vm1354, %v254, -1e+30
        %v1371 = vsel %vm1355, %v255, -1e+30
        %v1372 = vsel %vm268, %v1356, -inf
        %v1373 = vsel %vm268, %v1357, -inf
        %v1374 = vsel %vm268, %v1358, -inf
        %v1375 = vsel %vm268, %v1359, -inf
        %v1376 = vsel %vm268, %v1360, -inf
        %v1377 = vmax.f32 %v1372, %v1376
        %v1378 = vsel %vm268, %v1361, -inf
        %v1379 = vmax.f32 %v1373, %v1378
        %v1380 = vsel %vm268, %v1362, -inf
        %v1381 = vmax.f32 %v1374, %v1380
        %v1382 = vsel %vm268, %v1363, -inf
        %v1383 = vmax.f32 %v1375, %v1382
        %v1384 = vsel %vm268, %v1364, -inf
        %v1385 = vmax.f32 %v1377, %v1384
        %v1386 = vsel %vm268, %v1365, -inf
        %v1387 = vmax.f32 %v1379, %v1386
        %v1388 = vsel %vm268, %v1366, -inf
        %v1389 = vmax.f32 %v1381, %v1388
        %v1390 = vsel %vm268, %v1367, -inf
        %v1391 = vmax.f32 %v1383, %v1390
        %v1392 = vsel %vm268, %v1368, -inf
        %v1393 = vmax.f32 %v1385, %v1392
        %v1394 = vsel %vm268, %v1369, -inf
        %v1395 = vmax.f32 %v1387, %v1394
        %v1396 = vsel %vm268, %v1370, -inf
        %v1397 = vmax.f32 %v1389, %v1396
        %v1398 = vsel %vm268, %v1371, -inf
        %v1399 = vmax.f32 %v1391, %v1398
        %v1400 = vmax.f32 %v1393, %v1395
        %v1401 = vmax.f32 %v1397, %v1399
        %v1402 = vmax.f32 %v1400, %v1401
        %v1403 = vrot.slane %v1402, 4
        %v1404 = vmax.f32 %v1402, %v1403
        %v1405 = vrot.slane %v1404, 2
        %v1406 = vmax.f32 %v1404, %v1405
        %v1407 = vrot.slane %v1406, 1
        %v1408 = vmax.f32 %v1406, %v1407
        %vm1409 = vcmp.eq.f32.partialorder %v240, 1.0
        %vm1410 = vcmp.eq.f32.partialorder %v241, 1.0
        %vm1411 = vcmp.eq.f32.partialorder %v242, 1.0
        %vm1412 = vcmp.eq.f32.partialorder %v243, 1.0
        %vm1413 = vcmp.eq.f32.partialorder %v244, 1.0
        %vm1414 = vcmp.eq.f32.partialorder %v245, 1.0
        %vm1415 = vcmp.eq.f32.partialorder %v246, 1.0
        %vm1416 = vcmp.eq.f32.partialorder %v247, 1.0
        %vm1417 = vcmp.eq.f32.partialorder %v248, 1.0
        %vm1418 = vcmp.eq.f32.partialorder %v249, 1.0
        %vm1419 = vcmp.eq.f32.partialorder %v250, 1.0
        %vm1420 = vcmp.eq.f32.partialorder %v251, 1.0
        %vm1421 = vcmp.eq.f32.partialorder %v252, 1.0
        %vm1422 = vcmp.eq.f32.partialorder %v253, 1.0
        %vm1423 = vcmp.eq.f32.partialorder %v254, 1.0
        %vm1424 = vcmp.eq.f32.partialorder %v255, 1.0
        %v1425 = vsel %vm1409, 1, 0
        %v1426 = vsel %vm1410, 1, 0
        %v1427 = vsel %vm1411, 1, 0
        %v1428 = vsel %vm1412, 1, 0
        %v1429 = vsel %vm1413, 1, 0
        %v1430 = vsel %vm1414, 1, 0
        %v1431 = vsel %vm1415, 1, 0
        %v1432 = vsel %vm1416, 1, 0
        %v1433 = vsel %vm1417, 1, 0
        %v1434 = vsel %vm1418, 1, 0
        %v1435 = vsel %vm1419, 1, 0
        %v1436 = vsel %vm1420, 1, 0
        %v1437 = vsel %vm1421, 1, 0
        %v1438 = vsel %vm1422, 1, 0
        %v1439 = vsel %vm1423, 1, 0
        %v1440 = vsel %vm1424, 1, 0
        %1441 = vset.pattern.permute.xlu0 32
        %1442 = vperm.xlu0 %1441, %v1425
        %v1443 = vpop.permute.xlu0 %1442
        %1444 = vset.pattern.permute.xlu0 32
        %1445 = vperm.xlu0 %1444, %v1426
        %v1446 = vpop.permute.xlu0 %1445
        %1447 = vset.pattern.permute.xlu0 32
        %1448 = vperm.xlu0 %1447, %v1427
        %v1449 = vpop.permute.xlu0 %1448
        %1450 = vset.pattern.permute.xlu0 32
        %1451 = vperm.xlu0 %1450, %v1428
        %v1452 = vpop.permute.xlu0 %1451
        %1453 = vset.pattern.permute.xlu0 32
        %1454 = vperm.xlu0 %1453, %v1429
        %v1455 = vpop.permute.xlu0 %1454
        %1456 = vset.pattern.permute.xlu0 32
        %1457 = vperm.xlu0 %1456, %v1430
        %v1458 = vpop.permute.xlu0 %1457
        %1459 = vset.pattern.permute.xlu0 32
        %1460 = vperm.xlu0 %1459, %v1431
        %v1461 = vpop.permute.xlu0 %1460
        %1462 = vset.pattern.permute.xlu0 32
        %1463 = vperm.xlu0 %1462, %v1432
        %v1464 = vpop.permute.xlu0 %1463
        %1465 = vset.pattern.permute.xlu0 32
        %1466 = vperm.xlu0 %1465, %v1433
        %v1467 = vpop.permute.xlu0 %1466
        %1468 = vset.pattern.permute.xlu0 32
        %1469 = vperm.xlu0 %1468, %v1434
        %v1470 = vpop.permute.xlu0 %1469
        %1471 = vset.pattern.permute.xlu0 32
        %1472 = vperm.xlu0 %1471, %v1435
        %v1473 = vpop.permute.xlu0 %1472
        %1474 = vset.pattern.permute.xlu0 32
        %1475 = vperm.xlu0 %1474, %v1436
        %v1476 = vpop.permute.xlu0 %1475
        %1477 = vset.pattern.permute.xlu0 32
        %1478 = vperm.xlu0 %1477, %v1437
        %v1479 = vpop.permute.xlu0 %1478
        %1480 = vset.pattern.permute.xlu0 32
        %1481 = vperm.xlu0 %1480, %v1438
        %v1482 = vpop.permute.xlu0 %1481
        %1483 = vset.pattern.permute.xlu0 32
        %1484 = vperm.xlu0 %1483, %v1439
        %v1485 = vpop.permute.xlu0 %1484
        %1486 = vset.pattern.permute.xlu0 32
        %1487 = vperm.xlu0 %1486, %v1440
        %v1488 = vpop.permute.xlu0 %1487
        %vm1489 = vcmp.eq.s32.totalorder %v1443, 1
        %vm1490 = vcmp.eq.s32.totalorder %v1446, 1
        %vm1491 = vcmp.eq.s32.totalorder %v1449, 1
        %vm1492 = vcmp.eq.s32.totalorder %v1452, 1
        %vm1493 = vcmp.eq.s32.totalorder %v1455, 1
        %vm1494 = vcmp.eq.s32.totalorder %v1458, 1
        %vm1495 = vcmp.eq.s32.totalorder %v1461, 1
        %vm1496 = vcmp.eq.s32.totalorder %v1464, 1
        %vm1497 = vcmp.eq.s32.totalorder %v1467, 1
        %vm1498 = vcmp.eq.s32.totalorder %v1470, 1
        %vm1499 = vcmp.eq.s32.totalorder %v1473, 1
        %vm1500 = vcmp.eq.s32.totalorder %v1476, 1
        %vm1501 = vcmp.eq.s32.totalorder %v1479, 1
        %vm1502 = vcmp.eq.s32.totalorder %v1482, 1
        %vm1503 = vcmp.eq.s32.totalorder %v1485, 1
        %vm1504 = vcmp.eq.s32.totalorder %v1488, 1
        %v1505 = vsel %vm1489, %v240, -1e+30
        %v1506 = vsel %vm1490, %v241, -1e+30
        %v1507 = vsel %vm1491, %v242, -1e+30
        %v1508 = vsel %vm1492, %v243, -1e+30
        %v1509 = vsel %vm1493, %v244, -1e+30
        %v1510 = vsel %vm1494, %v245, -1e+30
        %v1511 = vsel %vm1495, %v246, -1e+30
        %v1512 = vsel %vm1496, %v247, -1e+30
        %v1513 = vsel %vm1497, %v248, -1e+30
        %v1514 = vsel %vm1498, %v249, -1e+30
        %v1515 = vsel %vm1499, %v250, -1e+30
        %v1516 = vsel %vm1500, %v251, -1e+30
        %v1517 = vsel %vm1501, %v252, -1e+30
        %v1518 = vsel %vm1502, %v253, -1e+30
        %v1519 = vsel %vm1503, %v254, -1e+30
        %v1520 = vsel %vm1504, %v255, -1e+30
        %v1521 = vsel %vm268, %v1505, -inf
        %v1522 = vsel %vm268, %v1506, -inf
        %v1523 = vsel %vm268, %v1507, -inf
        %v1524 = vsel %vm268, %v1508, -inf
        %v1525 = vsel %vm268, %v1509, -inf
        %v1526 = vmax.f32 %v1521, %v1525
        %v1527 = vsel %vm268, %v1510, -inf
        %v1528 = vmax.f32 %v1522, %v1527
        %v1529 = vsel %vm268, %v1511, -inf
        %v1530 = vmax.f32 %v1523, %v1529
        %v1531 = vsel %vm268, %v1512, -inf
        %v1532 = vmax.f32 %v1524, %v1531
        %v1533 = vsel %vm268, %v1513, -inf
        %v1534 = vmax.f32 %v1526, %v1533
        %v1535 = vsel %vm268, %v1514, -inf
        %v1536 = vmax.f32 %v1528, %v1535
        %v1537 = vsel %vm268, %v1515, -inf
        %v1538 = vmax.f32 %v1530, %v1537
        %v1539 = vsel %vm268, %v1516, -inf
        %v1540 = vmax.f32 %v1532, %v1539
        %v1541 = vsel %vm268, %v1517, -inf
        %v1542 = vmax.f32 %v1534, %v1541
        %v1543 = vsel %vm268, %v1518, -inf
        %v1544 = vmax.f32 %v1536, %v1543
        %v1545 = vsel %vm268, %v1519, -inf
        %v1546 = vmax.f32 %v1538, %v1545
        %v1547 = vsel %vm268, %v1520, -inf
        %v1548 = vmax.f32 %v1540, %v1547
        %v1549 = vmax.f32 %v1542, %v1544
        %v1550 = vmax.f32 %v1546, %v1548
        %v1551 = vmax.f32 %v1549, %v1550
        %v1552 = vrot.slane %v1551, 4
        %v1553 = vmax.f32 %v1551, %v1552
        %v1554 = vrot.slane %v1553, 2
        %v1555 = vmax.f32 %v1553, %v1554
        %v1556 = vrot.slane %v1555, 1
        %v1557 = vmax.f32 %v1555, %v1556
        %vm1558 = vcmp.eq.f32.partialorder %v240, 2.0
        %vm1559 = vcmp.eq.f32.partialorder %v241, 2.0
        %vm1560 = vcmp.eq.f32.partialorder %v242, 2.0
        %vm1561 = vcmp.eq.f32.partialorder %v243, 2.0
        %vm1562 = vcmp.eq.f32.partialorder %v244, 2.0
        %vm1563 = vcmp.eq.f32.partialorder %v245, 2.0
        %vm1564 = vcmp.eq.f32.partialorder %v246, 2.0
        %vm1565 = vcmp.eq.f32.partialorder %v247, 2.0
        %vm1566 = vcmp.eq.f32.partialorder %v248, 2.0
        %vm1567 = vcmp.eq.f32.partialorder %v249, 2.0
        %vm1568 = vcmp.eq.f32.partialorder %v250, 2.0
        %vm1569 = vcmp.eq.f32.partialorder %v251, 2.0
        %vm1570 = vcmp.eq.f32.partialorder %v252, 2.0
        %vm1571 = vcmp.eq.f32.partialorder %v253, 2.0
        %vm1572 = vcmp.eq.f32.partialorder %v254, 2.0
        %vm1573 = vcmp.eq.f32.partialorder %v255, 2.0
        %v1574 = vsel %vm1558, 1, 0
        %v1575 = vsel %vm1559, 1, 0
        %v1576 = vsel %vm1560, 1, 0
        %v1577 = vsel %vm1561, 1, 0
        %v1578 = vsel %vm1562, 1, 0
        %v1579 = vsel %vm1563, 1, 0
        %v1580 = vsel %vm1564, 1, 0
        %v1581 = vsel %vm1565, 1, 0
        %v1582 = vsel %vm1566, 1, 0
        %v1583 = vsel %vm1567, 1, 0
        %v1584 = vsel %vm1568, 1, 0
        %v1585 = vsel %vm1569, 1, 0
        %v1586 = vsel %vm1570, 1, 0
        %v1587 = vsel %vm1571, 1, 0
        %v1588 = vsel %vm1572, 1, 0
        %v1589 = vsel %vm1573, 1, 0
        %1590 = vset.pattern.permute.xlu0 32
        %1591 = vperm.xlu0 %1590, %v1574
        %v1592 = vpop.permute.xlu0 %1591
        %1593 = vset.pattern.permute.xlu0 32
        %1594 = vperm.xlu0 %1593, %v1575
        %v1595 = vpop.permute.xlu0 %1594
        %1596 = vset.pattern.permute.xlu0 32
        %1597 = vperm.xlu0 %1596, %v1576
        %v1598 = vpop.permute.xlu0 %1597
        %1599 = vset.pattern.permute.xlu0 32
        %1600 = vperm.xlu0 %1599, %v1577
        %v1601 = vpop.permute.xlu0 %1600
        %1602 = vset.pattern.permute.xlu0 32
        %1603 = vperm.xlu0 %1602, %v1578
        %v1604 = vpop.permute.xlu0 %1603
        %1605 = vset.pattern.permute.xlu0 32
        %1606 = vperm.xlu0 %1605, %v1579
        %v1607 = vpop.permute.xlu0 %1606
        %1608 = vset.pattern.permute.xlu0 32
        %1609 = vperm.xlu0 %1608, %v1580
        %v1610 = vpop.permute.xlu0 %1609
        %1611 = vset.pattern.permute.xlu0 32
        %1612 = vperm.xlu0 %1611, %v1581
        %v1613 = vpop.permute.xlu0 %1612
        %1614 = vset.pattern.permute.xlu0 32
        %1615 = vperm.xlu0 %1614, %v1582
        %v1616 = vpop.permute.xlu0 %1615
        %1617 = vset.pattern.permute.xlu0 32
        %1618 = vperm.xlu0 %1617, %v1583
        %v1619 = vpop.permute.xlu0 %1618
        %1620 = vset.pattern.permute.xlu0 32
        %1621 = vperm.xlu0 %1620, %v1584
        %v1622 = vpop.permute.xlu0 %1621
        %1623 = vset.pattern.permute.xlu0 32
        %1624 = vperm.xlu0 %1623, %v1585
        %v1625 = vpop.permute.xlu0 %1624
        %1626 = vset.pattern.permute.xlu0 32
        %1627 = vperm.xlu0 %1626, %v1586
        %v1628 = vpop.permute.xlu0 %1627
        %1629 = vset.pattern.permute.xlu0 32
        %1630 = vperm.xlu0 %1629, %v1587
        %v1631 = vpop.permute.xlu0 %1630
        %1632 = vset.pattern.permute.xlu0 32
        %1633 = vperm.xlu0 %1632, %v1588
        %v1634 = vpop.permute.xlu0 %1633
        %1635 = vset.pattern.permute.xlu0 32
        %1636 = vperm.xlu0 %1635, %v1589
        %v1637 = vpop.permute.xlu0 %1636
        %vm1638 = vcmp.eq.s32.totalorder %v1592, 1
        %vm1639 = vcmp.eq.s32.totalorder %v1595, 1
        %vm1640 = vcmp.eq.s32.totalorder %v1598, 1
        %vm1641 = vcmp.eq.s32.totalorder %v1601, 1
        %vm1642 = vcmp.eq.s32.totalorder %v1604, 1
        %vm1643 = vcmp.eq.s32.totalorder %v1607, 1
        %vm1644 = vcmp.eq.s32.totalorder %v1610, 1
        %vm1645 = vcmp.eq.s32.totalorder %v1613, 1
        %vm1646 = vcmp.eq.s32.totalorder %v1616, 1
        %vm1647 = vcmp.eq.s32.totalorder %v1619, 1
        %vm1648 = vcmp.eq.s32.totalorder %v1622, 1
        %vm1649 = vcmp.eq.s32.totalorder %v1625, 1
        %vm1650 = vcmp.eq.s32.totalorder %v1628, 1
        %vm1651 = vcmp.eq.s32.totalorder %v1631, 1
        %vm1652 = vcmp.eq.s32.totalorder %v1634, 1
        %vm1653 = vcmp.eq.s32.totalorder %v1637, 1
        %v1654 = vsel %vm1638, %v240, -1e+30
        %v1655 = vsel %vm1639, %v241, -1e+30
        %v1656 = vsel %vm1640, %v242, -1e+30
        %v1657 = vsel %vm1641, %v243, -1e+30
        %v1658 = vsel %vm1642, %v244, -1e+30
        %v1659 = vsel %vm1643, %v245, -1e+30
        %v1660 = vsel %vm1644, %v246, -1e+30
        %v1661 = vsel %vm1645, %v247, -1e+30
        %v1662 = vsel %vm1646, %v248, -1e+30
        %v1663 = vsel %vm1647, %v249, -1e+30
        %v1664 = vsel %vm1648, %v250, -1e+30
        %v1665 = vsel %vm1649, %v251, -1e+30
        %v1666 = vsel %vm1650, %v252, -1e+30
        %v1667 = vsel %vm1651, %v253, -1e+30
        %v1668 = vsel %vm1652, %v254, -1e+30
        %v1669 = vsel %vm1653, %v255, -1e+30
        %v1670 = vsel %vm268, %v1654, -inf
        %v1671 = vsel %vm268, %v1655, -inf
        %v1672 = vsel %vm268, %v1656, -inf
        %v1673 = vsel %vm268, %v1657, -inf
        %v1674 = vsel %vm268, %v1658, -inf
        %v1675 = vmax.f32 %v1670, %v1674
        %v1676 = vsel %vm268, %v1659, -inf
        %v1677 = vmax.f32 %v1671, %v1676
        %v1678 = vsel %vm268, %v1660, -inf
        %v1679 = vmax.f32 %v1672, %v1678
        %v1680 = vsel %vm268, %v1661, -inf
        %v1681 = vmax.f32 %v1673, %v1680
        %v1682 = vsel %vm268, %v1662, -inf
        %v1683 = vmax.f32 %v1675, %v1682
        %v1684 = vsel %vm268, %v1663, -inf
        %v1685 = vmax.f32 %v1677, %v1684
        %v1686 = vsel %vm268, %v1664, -inf
        %v1687 = vmax.f32 %v1679, %v1686
        %v1688 = vsel %vm268, %v1665, -inf
        %v1689 = vmax.f32 %v1681, %v1688
        %v1690 = vsel %vm268, %v1666, -inf
        %v1691 = vmax.f32 %v1683, %v1690
        %v1692 = vsel %vm268, %v1667, -inf
        %v1693 = vmax.f32 %v1685, %v1692
        %v1694 = vsel %vm268, %v1668, -inf
        %v1695 = vmax.f32 %v1687, %v1694
        %v1696 = vsel %vm268, %v1669, -inf
        %v1697 = vmax.f32 %v1689, %v1696
        %v1698 = vmax.f32 %v1691, %v1693
        %v1699 = vmax.f32 %v1695, %v1697
        %v1700 = vmax.f32 %v1698, %v1699
        %v1701 = vrot.slane %v1700, 4
        %v1702 = vmax.f32 %v1700, %v1701
        %v1703 = vrot.slane %v1702, 2
        %v1704 = vmax.f32 %v1702, %v1703
        %v1705 = vrot.slane %v1704, 1
        %v1706 = vmax.f32 %v1704, %v1705
        %vm1707 = vcmask 1040384
        %v1708 = vsel %vm1707, %v1408, %v1557
        %vm1709 = vcmask 1041408
        %v1710 = vsel %vm1709, %v1708, %v1706
        %vm1711 = vcmask 1042432
        %v1712 = vsel %vm1711, %v1710, -1e+30
        %v1713 = vld [vmem:[#allocation4] sm:$0xff]
        %v1714 = vmax.f32 %v1713, %v1712
        %1715 = vst.msk [vmem:[#allocation4] sm:$0xff] %vm268, %v1714
        %p1716 = scmp.eq.s32.totalorder %s17, 1
        // Predicated region
        $region45: #{tpu_custom_call.1} parent=39 // pred_check
          %p1717 = pneg %p1716
        $region46: #{tpu_custom_call.1} parent=39 // pred_check_branch
          %1719 = sbr.rel (%p1717) target = $region48
        $region47: #{tpu_custom_call.1} parent=39 // pred_region
          %v1720 = vld [vmem:[#allocation5] sm:$0xff]
          %v1721 = vmax.f32 %v1720, 1.0
          %v1722 = vld [vmem:[#allocation2] sm:$0xff]
          %1724 = vset.pattern.permute.xlu0 0
          %1725 = vperm.xlu0 %1724, %v1721
          %v1726 = vpop.permute.xlu0 %1725
          %v1728 = vrcp.pop %v1726
          %v1729 = vmul.f32 %v1722, %v1728
          %v1730 = vld [vmem:[#allocation3] sm:$0xff]
          %v1731 = vld [vmem:[#allocation7] sm:$0x1]
          %v1732 = vmax.f32 %v1731, 1e-30
          %v1734 = vlaneseq
          %v1735 = vshrl.u32 %v1734, 7
          %v1736 = vsub.s32 0, %v1735
          %v1737 = vrot.slane %v1732, %v1736
          %1738 = vset.pattern.permute.xlu0 0
          %1739 = vperm.xlu0 %1738, %v1737
          %v1740 = vpop.permute.xlu0 %1739
          %v1742 = vrcp.pop %v1740
          %v1743 = vmul.f32 %v1730, %v1742
          %v1744 = vld [vmem:[#allocation4] sm:$0xff]
          %v1745 = vld [vmem:[%s4] sm:$0xff]
          %v1746 = vld [vmem:[%s4 + $0x8] sm:$0xff]
          %v1747 = vld [vmem:[%s4 + $0x10] sm:$0xff]
          %v1748 = vld [vmem:[%s4 + $0x18] sm:$0xff]
          %v1749 = vld [vmem:[%s4 + $0x20] sm:$0xff]
          %v1750 = vld [vmem:[%s4 + $0x28] sm:$0xff]
          %v1751 = vld [vmem:[%s4 + $0x30] sm:$0xff]
          %v1752 = vld [vmem:[%s4 + $0x38] sm:$0xff]
          %v1753 = vld [vmem:[%s4 + $0x40] sm:$0xff]
          %v1754 = vld [vmem:[%s4 + $0x48] sm:$0xff]
          %v1755 = vld [vmem:[%s4 + $0x50] sm:$0xff]
          %v1756 = vld [vmem:[%s4 + $0x58] sm:$0xff]
          %v1758 = vsel %vm268, %v1744, 0
          %1760 = vmatprep.subr.mxu0 0.0
          %1761 = vmatpush1.msra.mxu0 %v1749
          %1762 = vmatprep.subr.mxu0 0.0
          %1763 = vmatpush1.msra.mxu0 %v1750
          %1764 = vmatprep.subr.mxu0 0.0
          %1765 = vmatpush1.msra.mxu0 %v1751
          %1766 = vmatprep.subr.mxu0 0.0
          %1767 = vmatpush1.msra.mxu0 %v1752
          %1768 = vmatprep.subr.mxu0 0.0
          %1769 = vmatpush1.msra.mxu0 0.0
          %1770 = vmatprep.subr.mxu0 0.0
          %1771 = vmatpush1.msra.mxu0 0.0
          %1772 = vmatprep.subr.mxu0 0.0
          %1773 = vmatpush1.msra.mxu0 0.0
          %1774 = vmatprep.subr.mxu0 0.0
          %1775 = vmatpush1.msra.mxu0 0.0
          %1776 = vmatprep.subr.mxu0 0.0
          %1777 = vmatpush1.msra.mxu0 0.0
          %1778 = vmatprep.subr.mxu0 0.0
          %1779 = vmatpush1.msra.mxu0 0.0
          %1780 = vmatprep.subr.mxu0 0.0
          %1781 = vmatpush1.msra.mxu0 0.0
          %1782 = vmatprep.subr.mxu0 0.0
          %1783 = vmatpush1.msra.mxu0 0.0
          %1784 = vmatprep.subr.mxu0 0.0
          %1785 = vmatpush1.msra.mxu0 0.0
          %1786 = vmatprep.subr.mxu0 0.0
          %1787 = vmatpush1.msra.mxu0 0.0
          %1788 = vmatprep.subr.mxu0 0.0
          %1789 = vmatpush1.msra.mxu0 0.0
          %1790 = vmatprep.subr.mxu0 0.0
          %1791 = vmatpush1.msra.mxu0 0.0
          %1792 = vmatprep.subr.mxu0 0.0
          %1793 = vmatpush1.msra.mxu0 0.0
          %1794 = vmatprep.subr.mxu0 0.0
          %1795 = vmatpush1.msra.mxu0 0.0
          %1796 = vmatprep.subr.mxu0 0.0
          %1797 = vmatpush1.msra.mxu0 0.0
          %1798 = vmatprep.subr.mxu0 0.0
          %1799 = vmatpush1.msra.mxu0 0.0
          %1800 = vmatprep.subr.mxu0 0.0
          %1801 = vmatpush1.msra.mxu0 0.0
          %1802 = vmatprep.subr.mxu0 0.0
          %1803 = vmatpush1.msra.mxu0 0.0
          %1804 = vmatprep.subr.mxu0 0.0
          %1805 = vmatpush1.msra.mxu0 0.0
          %1806 = vmatprep.subr.mxu0 0.0
          %1807 = vmatpush1.msra.mxu0 0.0
          %1808 = vmatprep.subr.mxu0 0.0
          %1809 = vmatpush1.msra.mxu0 0.0
          %1810 = vmatprep.subr.mxu0 0.0
          %1811 = vmatpush1.msra.mxu0 0.0
          %1812 = vmatprep.subr.mxu0 0.0
          %1813 = vmatpush1.msra.mxu0 0.0
          %1814 = vmatprep.subr.mxu0 0.0
          %1815 = vmatpush1.msra.mxu0 0.0
          %1816 = vmatprep.subr.mxu0 0.0
          %1817 = vmatpush1.msra.mxu0 0.0
          %1818 = vmatprep.subr.mxu0 0.0
          %1819 = vmatpush1.msra.mxu0 0.0
          %1820 = vmatprep.subr.mxu0 0.0
          %1821 = vmatpush1.msra.mxu0 0.0
          %1822 = vmatprep.subr.mxu0 0.0
          %1823 = vmatpush1.msra.mxu0 0.0
          %1824 = vmatprep.mubr.f32.mxu0 0.0
          %1825 = vmatmul.mubr.f32.gmra.mrb[0].mxu0 %v1758
          %v1826 = vpop.f32.mrb[0].mxu0
          %v1827 = vadd.f32 0.0, %v1826
          %v1828 = vpop.f32.mrb[0].mxu0
          %1829 = vdwg.mxu0
          %v1831 = vsel %vm268, %v1729, 0
          %1833 = vmatprep.subr.mxu0 0.0
          %1834 = vmatpush1.msra.mxu0 %v1745
          %1835 = vmatprep.subr.mxu0 0.0
          %1836 = vmatpush1.msra.mxu0 %v1746
          %1837 = vmatprep.subr.mxu0 0.0
          %1838 = vmatpush1.msra.mxu0 %v1747
          %1839 = vmatprep.subr.mxu0 0.0
          %1840 = vmatpush1.msra.mxu0 %v1748
          %1841 = vmatprep.subr.mxu0 0.0
          %1842 = vmatpush1.msra.mxu0 0.0
          %1843 = vmatprep.subr.mxu0 0.0
          %1844 = vmatpush1.msra.mxu0 0.0
          %1845 = vmatprep.subr.mxu0 0.0
          %1846 = vmatpush1.msra.mxu0 0.0
          %1847 = vmatprep.subr.mxu0 0.0
          %1848 = vmatpush1.msra.mxu0 0.0
          %1849 = vmatprep.subr.mxu0 0.0
          %1850 = vmatpush1.msra.mxu0 0.0
          %1851 = vmatprep.subr.mxu0 0.0
          %1852 = vmatpush1.msra.mxu0 0.0
          %1853 = vmatprep.subr.mxu0 0.0
          %1854 = vmatpush1.msra.mxu0 0.0
          %1855 = vmatprep.subr.mxu0 0.0
          %1856 = vmatpush1.msra.mxu0 0.0
          %1857 = vmatprep.subr.mxu0 0.0
          %1858 = vmatpush1.msra.mxu0 0.0
          %1859 = vmatprep.subr.mxu0 0.0
          %1860 = vmatpush1.msra.mxu0 0.0
          %1861 = vmatprep.subr.mxu0 0.0
          %1862 = vmatpush1.msra.mxu0 0.0
          %1863 = vmatprep.subr.mxu0 0.0
          %1864 = vmatpush1.msra.mxu0 0.0
          %1865 = vmatprep.subr.mxu0 0.0
          %1866 = vmatpush1.msra.mxu0 0.0
          %1867 = vmatprep.subr.mxu0 0.0
          %1868 = vmatpush1.msra.mxu0 0.0
          %1869 = vmatprep.subr.mxu0 0.0
          %1870 = vmatpush1.msra.mxu0 0.0
          %1871 = vmatprep.subr.mxu0 0.0
          %1872 = vmatpush1.msra.mxu0 0.0
          %1873 = vmatprep.subr.mxu0 0.0
          %1874 = vmatpush1.msra.mxu0 0.0
          %1875 = vmatprep.subr.mxu0 0.0
          %1876 = vmatpush1.msra.mxu0 0.0
          %1877 = vmatprep.subr.mxu0 0.0
          %1878 = vmatpush1.msra.mxu0 0.0
          %1879 = vmatprep.subr.mxu0 0.0
          %1880 = vmatpush1.msra.mxu0 0.0
          %1881 = vmatprep.subr.mxu0 0.0
          %1882 = vmatpush1.msra.mxu0 0.0
          %1883 = vmatprep.subr.mxu0 0.0
          %1884 = vmatpush1.msra.mxu0 0.0
          %1885 = vmatprep.subr.mxu0 0.0
          %1886 = vmatpush1.msra.mxu0 0.0
          %1887 = vmatprep.subr.mxu0 0.0
          %1888 = vmatpush1.msra.mxu0 0.0
          %1889 = vmatprep.subr.mxu0 0.0
          %1890 = vmatpush1.msra.mxu0 0.0
          %1891 = vmatprep.subr.mxu0 0.0
          %1892 = vmatpush1.msra.mxu0 0.0
          %1893 = vmatprep.subr.mxu0 0.0
          %1894 = vmatpush1.msra.mxu0 0.0
          %1895 = vmatprep.subr.mxu0 0.0
          %1896 = vmatpush1.msra.mxu0 0.0
          %1897 = vmatprep.mubr.f32.mxu0 0.0
          %1898 = vmatmul.mubr.f32.gmra.mrb[0].mxu0 %v1831
          %v1899 = vpop.f32.mrb[0].mxu0
          %v1900 = vadd.f32 %v1827, %v1899
          %v1901 = vpop.f32.mrb[0].mxu0
          %1902 = vdwg.mxu0
          %v1904 = vsel %vm268, %v1743, 0
          %1906 = vmatprep.subr.mxu0 0.0
          %1907 = vmatpush1.msra.mxu0 %v1753
          %1908 = vmatprep.subr.mxu0 0.0
          %1909 = vmatpush1.msra.mxu0 %v1754
          %1910 = vmatprep.subr.mxu0 0.0
          %1911 = vmatpush1.msra.mxu0 %v1755
          %1912 = vmatprep.subr.mxu0 0.0
          %1913 = vmatpush1.msra.mxu0 %v1756
          %1914 = vmatprep.subr.mxu0 0.0
          %1915 = vmatpush1.msra.mxu0 0.0
          %1916 = vmatprep.subr.mxu0 0.0
          %1917 = vmatpush1.msra.mxu0 0.0
          %1918 = vmatprep.subr.mxu0 0.0
          %1919 = vmatpush1.msra.mxu0 0.0
          %1920 = vmatprep.subr.mxu0 0.0
          %1921 = vmatpush1.msra.mxu0 0.0
          %1922 = vmatprep.subr.mxu0 0.0
          %1923 = vmatpush1.msra.mxu0 0.0
          %1924 = vmatprep.subr.mxu0 0.0
          %1925 = vmatpush1.msra.mxu0 0.0
          %1926 = vmatprep.subr.mxu0 0.0
          %1927 = vmatpush1.msra.mxu0 0.0
          %1928 = vmatprep.subr.mxu0 0.0
          %1929 = vmatpush1.msra.mxu0 0.0
          %1930 = vmatprep.subr.mxu0 0.0
          %1931 = vmatpush1.msra.mxu0 0.0
          %1932 = vmatprep.subr.mxu0 0.0
          %1933 = vmatpush1.msra.mxu0 0.0
          %1934 = vmatprep.subr.mxu0 0.0
          %1935 = vmatpush1.msra.mxu0 0.0
          %1936 = vmatprep.subr.mxu0 0.0
          %1937 = vmatpush1.msra.mxu0 0.0
          %1938 = vmatprep.subr.mxu0 0.0
          %1939 = vmatpush1.msra.mxu0 0.0
          %1940 = vmatprep.subr.mxu0 0.0
          %1941 = vmatpush1.msra.mxu0 0.0
          %1942 = vmatprep.subr.mxu0 0.0
          %1943 = vmatpush1.msra.mxu0 0.0
          %1944 = vmatprep.subr.mxu0 0.0
          %1945 = vmatpush1.msra.mxu0 0.0
          %1946 = vmatprep.subr.mxu0 0.0
          %1947 = vmatpush1.msra.mxu0 0.0
          %1948 = vmatprep.subr.mxu0 0.0
          %1949 = vmatpush1.msra.mxu0 0.0
          %1950 = vmatprep.subr.mxu0 0.0
          %1951 = vmatpush1.msra.mxu0 0.0
          %1952 = vmatprep.subr.mxu0 0.0
          %1953 = vmatpush1.msra.mxu0 0.0
          %1954 = vmatprep.subr.mxu0 0.0
          %1955 = vmatpush1.msra.mxu0 0.0
          %1956 = vmatprep.subr.mxu0 0.0
          %1957 = vmatpush1.msra.mxu0 0.0
          %1958 = vmatprep.subr.mxu0 0.0
          %1959 = vmatpush1.msra.mxu0 0.0
          %1960 = vmatprep.subr.mxu0 0.0
          %1961 = vmatpush1.msra.mxu0 0.0
          %1962 = vmatprep.subr.mxu0 0.0
          %1963 = vmatpush1.msra.mxu0 0.0
          %1964 = vmatprep.subr.mxu0 0.0
          %1965 = vmatpush1.msra.mxu0 0.0
          %1966 = vmatprep.subr.mxu0 0.0
          %1967 = vmatpush1.msra.mxu0 0.0
          %1968 = vmatprep.subr.mxu0 0.0
          %1969 = vmatpush1.msra.mxu0 0.0
          %1970 = vmatprep.mubr.f32.mxu0 0.0
          %1971 = vmatmul.mubr.f32.gmra.mrb[0].mxu0 %v1904
          %v1972 = vpop.f32.mrb[0].mxu0
          %v1973 = vadd.f32 0.0, %v1972
          %v1974 = vpop.f32.mrb[0].mxu0
          %1975 = vdwg.mxu0
          %v1976 = vadd.f32 %v1900, %v1973
          %v1977 = vld [vmem:[%s3 + $0x3] sm:$0x1]
          %v1978 = vlaneseq
          %v1979 = vshrl.u32 %v1978, 7
          %v1980 = vsub.s32 0, %v1979
          %v1981 = vrot.slane %v1977, %v1980
          %v1982 = vadd.f32 %v1976, %v1981
          %v1983 = vsel %vm268, %v1982, 0.0
          %1984 = vadd.xlane.f32.xlu0 %v1983
          %v1985 = vpop.xlane.xlu0 %1984
          %v1986 = vrcp.pop 32.0
          %v1987 = vmul.f32 %v1985, %v1986
          %v1988 = vsub.f32 %v1982, %v1987
          %v1989 = vmul.f32 %v1988, %v1988
          %v1990 = vsel %vm268, %v1989, 0.0
          %1991 = vadd.xlane.f32.xlu0 %v1990
          %v1992 = vpop.xlane.xlu0 %1991
          %v1993 = vmul.f32 %v1992, %v1986
          %v1994 = vadd.f32 %v1993, 1e-05
          %v1995 = vrsqrt.pop %v1994
          %v1996 = vmul.f32 %v1988, %v1995
          %v1997 = vld [vmem:[%s3 + $0x4] sm:$0x1]
          %v1998 = vlaneseq
          %v1999 = vshrl.u32 %v1998, 7
          %v2000 = vsub.s32 0, %v1999
          %v2001 = vrot.slane %v1997, %v2000
          %v2002 = vmul.f32 %v1996, %v2001
          %v2003 = vld [vmem:[%s3 + $0x5] sm:$0x1]
          %v2004 = vlaneseq
          %v2005 = vshrl.u32 %v2004, 7
          %v2006 = vsub.s32 0, %v2005
          %v2007 = vrot.slane %v2003, %v2006
          %v2008 = vadd.f32 %v2002, %v2007
          %v2009 = vxor.u32 %v2008, 2147483648
          %v2010 = vmul.f32 %v2009, 1.442695
          %v2011 = vpow.pop %v2010
          %v2012 = vadd.f32 %v2011, 1.0
          %v2013 = vrcp.pop %v2012
          %v2014 = vmul.f32 1.0, %v2013
          %v2015 = vmul.f32 %v2008, %v2014
          %2016 = vst.msk [vmem:[#allocation8] sm:$0xff] %vm268, %v2015
        $region48: #{tpu_custom_call.1} parent=39 // pred_fallthru
          _
        // Predicated region
        $region49: #{tpu_custom_call.1} parent=39 // pred_check
          %p2017 = pneg %p145
        $region50: #{tpu_custom_call.1} parent=39 // pred_check_branch
          %2019 = sbr.rel (%p2017) target = $region52
        $region51: #{tpu_custom_call.1} parent=39 // pred_region
          %s2021 = ssub.s32 128, 128
          %2022 = vsyncadd [#allocation9], %s2021
          %s2024 = sshll.u32 [#allocation8], 4
          %s2025 = int_to_ptr.vmem [resolvable:$true] %s2024
          %2027 = dma.vmem_to_hbm [thread:$0]  %s2025, 128, %s5, [#allocation9]
        $region52: #{tpu_custom_call.1} parent=39 // pred_fallthru
          _
        // Predicated region
        $region53: #{tpu_custom_call.1} parent=39 // pred_check
          %p2028 = pneg %p145
        $region54: #{tpu_custom_call.1} parent=39 // pred_check_branch
          %2030 = sbr.rel (%p2028) target = $region56
        $region55: #{tpu_custom_call.1} parent=39 // pred_region
          %2031 = dma.done [#allocation9], 128
        $region56: #{tpu_custom_call.1} parent=39 // pred_fallthru
          _
      $region40: #{tpu_custom_call.1} parent=5 // pred_fallthru
        _
      %p2032 = scmp.le.s32.totalorder 2, %s12
      // Predicated region
      $region57: #{tpu_custom_call.1} parent=5 // pred_check
        %p2033 = pneg %p2032
      $region58: #{tpu_custom_call.1} parent=5 // pred_check_branch
        %2035 = sbr.rel (%p2033) target = $region60
      $region59: #{tpu_custom_call.1} parent=5 // pred_region
        %s2036 = ssub.s32 %s12, 2
      $region60: #{tpu_custom_call.1} parent=5 // pred_fallthru
        _
    $region6: #{tpu_custom_call.1} parent=1 // loop_footer
      %s16 = sadd.s32 1, %s12
    $region7: #{tpu_custom_call.1} parent=1 // loop_footer_branch
      %11 = sbr.rel target = $region3
    $region8: #{tpu_custom_call.1} parent=1 // loop_exit
      _
    %2037 = vsyncpa [#allocation9], 1
    %s2038 = scalar_lea.sflag [#allocation9], 1
    %2039 = vsyncpa %s2038, 1

</llo_original>
